<compile_context>
chip_gen: v7x
topology: tpu7x:2x2x1
jax: 0.10.0
libtpu: 0.0.40
codegen_flags: <defaults>
</compile_context>

<pallas_src>
import functools

import jax
import jax.numpy as jnp
from jax.experimental import pallas as pl
from jax.experimental.pallas import tpu as pltpu

N_LATENTS = 32
HIDDEN = 512
N_OUT = 10
N_OUT_PAD = 128   # lane-dense padded width of the final layer


def _round_up(x, m):
    return (x + m - 1) // m * m


def _cdiv(a, b):
    return -(-a // b)


def _swish(x):
    """Swish with a single transcendental: x*sigmoid(x) = 0.5*x*(1+tanh(0.5*x)).

    tanh goes to the EUP slot; the mul/adds ride the VALU (which has slack).
    Python scalars are weakly typed, so this stays in x's dtype (f32 or bf16).
    """
    return 0.5 * x * (1.0 + jnp.tanh(0.5 * x))


def text_decoder_kernel(z_ref,
                        w1_ref, b1_ref,
                        w2_ref, b2_ref,
                        w3_ref, b3_ref,
                        w4_ref, b4_ref,
                        out_ref,
                        *, bf16_act):
    """Fused 4-layer MLP: three Linear+Swish blocks and a final (padded) Linear.

    Matmul inputs are bf16 (MXU native), accumulation is f32; biases are added
    on the f32 accumulator. The Swish is evaluated in bf16 on chips with a
    bf16 VPU/EUP (v6e/v7x), otherwise in f32 with a single cast to bf16.
    """
    def swish_to_bf16(h_f32):
        if bf16_act:
            return _swish(h_f32.astype(jnp.bfloat16))
        return _swish(h_f32).astype(jnp.bfloat16)

    x = z_ref[...]                                    # bf16 [tb, n_latents]

    h = jnp.dot(x, w1_ref[...],
                preferred_element_type=jnp.float32) + b1_ref[...]
    h = swish_to_bf16(h)

    h = jnp.dot(h, w2_ref[...],
                preferred_element_type=jnp.float32) + b2_ref[...]
    h = swish_to_bf16(h)

    h = jnp.dot(h, w3_ref[...],
                preferred_element_type=jnp.float32) + b3_ref[...]
    h = swish_to_bf16(h)

    y = jnp.dot(h, w4_ref[...],
                preferred_element_type=jnp.float32) + b4_ref[...]
    out_ref[...] = y.astype(out_ref.dtype)            # full 128-lane store


@functools.partial(jax.jit, static_argnames=("block_b",))
def text_decoder(z, params, block_b=1024):
    """Runs the fused TextDecoder MLP.

    z:      [B, n_latents] float32
    params: dict of w1,b1,...,w4,b4 (weights [in,out] f32, biases [1,out] f32)
    Returns [B, 10] float32 logits (matches the PyTorch module).
    """
    B, nl = z.shape

    # ---- generation-aware static choices (evaluated at trace time) ----------
    kind = jax.devices()[0].device_kind.lower()
    bf16_act = ("v6" in kind) or ("7" in kind)   # bf16 VPU/EUP chips only
    two_tc = "7" in kind                         # v7x: 2 TensorCores per chip

    # ---- batch tiling --------------------------------------------------------
    # Tile rows are a multiple of 32: bf16 packs 2 rows/sublane, so 8-row
    # blocks force relayout; 32 keeps vregs packed and the MXU well fed.
    block_b = max(32, _round_up(block_b, 32))
    tb = min(block_b, _round_up(B, 32))
    if two_tc and B > 64:
        # Split into an EVEN number of tiles so both TensorCores get equal
        # work (odd grids leave one core 33-50% idle at small grid sizes).
        n_tiles = max(2, _round_up(_cdiv(B, tb), 2))
        tb = min(block_b, _round_up(_cdiv(B, n_tiles), 32))
    # Single-TC chips (v5e/v6e): one tile whenever B fits -> no forced split.
    B_pad = _round_up(B, tb)
    grid = (B_pad // tb,)

    z_p = z.astype(jnp.bfloat16)
    if B_pad != B:
        z_p = jnp.pad(z_p, ((0, B_pad - B), (0, 0)))

    # ---- params: bf16 weights (MXU inputs), f32 biases; padded final layer --
    w1 = params["w1"].astype(jnp.bfloat16)
    w2 = params["w2"].astype(jnp.bfloat16)
    w3 = params["w3"].astype(jnp.bfloat16)
    w4 = jnp.pad(params["w4"],
                 ((0, 0), (0, N_OUT_PAD - N_OUT))).astype(jnp.bfloat16)
    b1 = params["b1"].astype(jnp.float32)
    b2 = params["b2"].astype(jnp.float32)
    b3 = params["b3"].astype(jnp.float32)
    b4 = jnp.pad(params["b4"].astype(jnp.float32),
                 ((0, 0), (0, N_OUT_PAD - N_OUT)))

    param_arrays = (w1, b1, w2, b2, w3, b3, w4, b4)
    param_bytes = sum(int(a.size) * a.dtype.itemsize for a in param_arrays)

    def full(arr):
        # Whole-array tile, constant block index across the grid (no re-DMA).
        return pl.BlockSpec(arr.shape, lambda i: (0, 0))

    # ---- explicit VMEM budget ------------------------------------------------
    # double-buffered I/O tiles + double-buffered resident params + a generous
    # allowance for the f32/bf16 activations and elementwise temporaries.
    io_bytes = 2 * (tb * nl * 2) + 2 * (tb * N_OUT_PAD * 4)
    act_bytes = 8 * tb * HIDDEN * 4
    vmem_limit_bytes = int(min(max(2 * param_bytes + io_bytes + act_bytes
                                   + (8 << 20), 32 << 20), 64 << 20))

    flops = 2 * B_pad * (nl * HIDDEN + 2 * HIDDEN * HIDDEN + HIDDEN * N_OUT_PAD)
    transcendentals = 3 * B_pad * HIDDEN          # one tanh per Swish element
    bytes_accessed = (z_p.size * z_p.dtype.itemsize
                      + B_pad * N_OUT_PAD * 4
                      + param_bytes)

    out = pl.pallas_call(
        functools.partial(text_decoder_kernel, bf16_act=bf16_act),
        out_shape=jax.ShapeDtypeStruct((B_pad, N_OUT_PAD), jnp.float32),
        grid=grid,
        in_specs=[
            pl.BlockSpec((tb, nl), lambda i: (i, 0)),   # z tile over batch
            full(w1), full(b1),
            full(w2), full(b2),
            full(w3), full(b3),
            full(w4), full(b4),
        ],
        out_specs=pl.BlockSpec((tb, N_OUT_PAD), lambda i: (i, 0)),
        compiler_params=pltpu.CompilerParams(
            dimension_semantics=("parallel",),
            vmem_limit_bytes=vmem_limit_bytes),
        cost_estimate=pl.CostEstimate(
            flops=int(flops),
            transcendentals=int(transcendentals),
            bytes_accessed=int(bytes_accessed)),
    )(z_p, w1, b1, w2, b2, w3, b3, w4, b4)

    # Strip the batch padding and the lane padding of the final layer.
    return out[:B, :N_OUT]


def init_params(key, n_latents=N_LATENTS, hidden=HIDDEN, n_out=N_OUT):
    """PyTorch-Linear-style init: U(-1/sqrt(fan_in), 1/sqrt(fan_in))."""
    dims = [(n_latents, hidden), (hidden, hidden), (hidden, hidden), (hidden, n_out)]
    params = {}
    for idx, (fan_in, fan_out) in enumerate(dims, start=1):
        key, kw, kb = jax.random.split(key, 3)
        bound = 1.0 / jnp.sqrt(jnp.float32(fan_in))
        params[f"w{idx}"] = jax.random.uniform(
            kw, (fan_in, fan_out), jnp.float32, minval=-bound, maxval=bound)
        params[f"b{idx}"] = jax.random.uniform(
            kb, (1, fan_out), jnp.float32, minval=-bound, maxval=bound)
    return params


def text_decoder_ref(z, params):
    """Pure-JAX f32 reference mirroring the PyTorch forward exactly."""
    def swish(x):
        return x * jax.nn.sigmoid(x)
    h = swish(z @ params["w1"] + params["b1"])
    h = swish(h @ params["w2"] + params["b2"])
    h = swish(h @ params["w3"] + params["b3"])
    return h @ params["w4"] + params["b4"]


if __name__ == "__main__":
    key = jax.random.PRNGKey(0)
    key, kz = jax.random.split(key)

    B = 8  # small batch for the demo
    z = jax.random.normal(kz, (B, N_LATENTS), jnp.float32)
    params = init_params(key)

    out = text_decoder(z, params)
    out = jax.block_until_ready(out)

    ref = text_decoder_ref(z, params)
    assert out.shape == (B, N_OUT), out.shape
    max_err = float(jnp.max(jnp.abs(out - ref)))
    # bf16 MXU inputs / bf16 activations loosen the tolerance vs. the f32 ref.
    assert jnp.allclose(out, ref, atol=5e-2, rtol=5e-2), max_err

    print("KERNEL_OK")
</pallas_src>

<mosaic_0001>
module attributes {stable_mosaic.version = 11 : i64} {
  func.func @text_decoder_kernel(%arg0: i32, %arg1: memref<32x32xbf16, #tpu.memory_space<vmem>>, %arg2: memref<32x512xbf16, #tpu.memory_space<vmem>>, %arg3: memref<1x512xf32, #tpu.memory_space<vmem>>, %arg4: memref<512x512xbf16, #tpu.memory_space<vmem>>, %arg5: memref<1x512xf32, #tpu.memory_space<vmem>>, %arg6: memref<512x512xbf16, #tpu.memory_space<vmem>>, %arg7: memref<1x512xf32, #tpu.memory_space<vmem>>, %arg8: memref<512x128xbf16, #tpu.memory_space<vmem>>, %arg9: memref<1x128xf32, #tpu.memory_space<vmem>>, %arg10: memref<32x128xf32, #tpu.memory_space<vmem>>) attributes {dimension_semantics = [#tpu.dimension_semantics<parallel>], iteration_bounds = array<i64: 1>, scalar_prefetch = 0 : i64, scratch_operands = 0 : i64, tpu.core_type = #tpu.core_type<tc>, window_params = [{transform_indices = @transform_0, window_bounds = array<i64: 32, 32>}, {pipeline_mode = #tpu.pipeline_mode<synchronous>, transform_indices = @transform_1, window_bounds = array<i64: 32, 512>}, {pipeline_mode = #tpu.pipeline_mode<synchronous>, transform_indices = @transform_2, window_bounds = array<i64: 1, 512>}, {pipeline_mode = #tpu.pipeline_mode<synchronous>, transform_indices = @transform_3, window_bounds = array<i64: 512, 512>}, {pipeline_mode = #tpu.pipeline_mode<synchronous>, transform_indices = @transform_4, window_bounds = array<i64: 1, 512>}, {pipeline_mode = #tpu.pipeline_mode<synchronous>, transform_indices = @transform_5, window_bounds = array<i64: 512, 512>}, {pipeline_mode = #tpu.pipeline_mode<synchronous>, transform_indices = @transform_6, window_bounds = array<i64: 1, 512>}, {pipeline_mode = #tpu.pipeline_mode<synchronous>, transform_indices = @transform_7, window_bounds = array<i64: 512, 128>}, {pipeline_mode = #tpu.pipeline_mode<synchronous>, transform_indices = @transform_8, window_bounds = array<i64: 1, 128>}, {transform_indices = @transform_9, window_bounds = array<i64: 32, 128>}]} {
    %c0 = arith.constant 0 : index
    %c0_0 = arith.constant 0 : index
    %0 = vector.load %arg1[%c0, %c0_0] : memref<32x32xbf16, #tpu.memory_space<vmem>>, vector<32x32xbf16>
    %c0_1 = arith.constant 0 : index
    %c0_2 = arith.constant 0 : index
    %1 = vector.load %arg2[%c0_1, %c0_2] : memref<32x512xbf16, #tpu.memory_space<vmem>>, vector<32x512xbf16>
    %cst = arith.constant dense<0.000000e+00> : vector<32x512xf32>
    %2 = tpu.matmul %0, %1, %cst {dimension_numbers = #tpu.dot_dimension_numbers<[1], [0], [0], [1], [0, 0, 1, 1], [], []>} : vector<32x32xbf16>, vector<32x512xbf16>, vector<32x512xf32> -> vector<32x512xf32>
    %c0_3 = arith.constant 0 : index
    %c0_4 = arith.constant 0 : index
    %3 = vector.load %arg3[%c0_3, %c0_4] : memref<1x512xf32, #tpu.memory_space<vmem>>, vector<1x512xf32>
    %4 = vector.broadcast %3 : vector<1x512xf32> to vector<32x512xf32>
    %5 = arith.addf %2, %4 : vector<32x512xf32>
    %cst_5 = arith.constant 5.000000e-01 : f32
    %6 = vector.broadcast %cst_5 : f32 to vector<32x512xf32>
    %7 = arith.mulf %6, %5 : vector<32x512xf32>
    %cst_6 = arith.constant 5.000000e-01 : f32
    %8 = vector.broadcast %cst_6 : f32 to vector<32x512xf32>
    %9 = arith.mulf %8, %5 : vector<32x512xf32>
    %10 = math.tanh %9 : vector<32x512xf32>
    %cst_7 = arith.constant 1.000000e+00 : f32
    %11 = vector.broadcast %cst_7 : f32 to vector<32x512xf32>
    %12 = arith.addf %11, %10 : vector<32x512xf32>
    %13 = arith.mulf %7, %12 : vector<32x512xf32>
    %14 = arith.truncf %13 : vector<32x512xf32> to vector<32x512xbf16>
    %c0_8 = arith.constant 0 : index
    %c0_9 = arith.constant 0 : index
    %15 = vector.load %arg4[%c0_8, %c0_9] : memref<512x512xbf16, #tpu.memory_space<vmem>>, vector<512x512xbf16>
    %cst_10 = arith.constant dense<0.000000e+00> : vector<32x512xf32>
    %16 = tpu.matmul %14, %15, %cst_10 {dimension_numbers = #tpu.dot_dimension_numbers<[1], [0], [0], [1], [0, 0, 1, 1], [], []>} : vector<32x512xbf16>, vector<512x512xbf16>, vector<32x512xf32> -> vector<32x512xf32>
    %c0_11 = arith.constant 0 : index
    %c0_12 = arith.constant 0 : index
    %17 = vector.load %arg5[%c0_11, %c0_12] : memref<1x512xf32, #tpu.memory_space<vmem>>, vector<1x512xf32>
    %18 = vector.broadcast %17 : vector<1x512xf32> to vector<32x512xf32>
    %19 = arith.addf %16, %18 : vector<32x512xf32>
    %cst_13 = arith.constant 5.000000e-01 : f32
    %20 = vector.broadcast %cst_13 : f32 to vector<32x512xf32>
    %21 = arith.mulf %20, %19 : vector<32x512xf32>
    %cst_14 = arith.constant 5.000000e-01 : f32
    %22 = vector.broadcast %cst_14 : f32 to vector<32x512xf32>
    %23 = arith.mulf %22, %19 : vector<32x512xf32>
    %24 = math.tanh %23 : vector<32x512xf32>
    %cst_15 = arith.constant 1.000000e+00 : f32
    %25 = vector.broadcast %cst_15 : f32 to vector<32x512xf32>
    %26 = arith.addf %25, %24 : vector<32x512xf32>
    %27 = arith.mulf %21, %26 : vector<32x512xf32>
    %28 = arith.truncf %27 : vector<32x512xf32> to vector<32x512xbf16>
    %c0_16 = arith.constant 0 : index
    %c0_17 = arith.constant 0 : index
    %29 = vector.load %arg6[%c0_16, %c0_17] : memref<512x512xbf16, #tpu.memory_space<vmem>>, vector<512x512xbf16>
    %cst_18 = arith.constant dense<0.000000e+00> : vector<32x512xf32>
    %30 = tpu.matmul %28, %29, %cst_18 {dimension_numbers = #tpu.dot_dimension_numbers<[1], [0], [0], [1], [0, 0, 1, 1], [], []>} : vector<32x512xbf16>, vector<512x512xbf16>, vector<32x512xf32> -> vector<32x512xf32>
    %c0_19 = arith.constant 0 : index
    %c0_20 = arith.constant 0 : index
    %31 = vector.load %arg7[%c0_19, %c0_20] : memref<1x512xf32, #tpu.memory_space<vmem>>, vector<1x512xf32>
    %32 = vector.broadcast %31 : vector<1x512xf32> to vector<32x512xf32>
    %33 = arith.addf %30, %32 : vector<32x512xf32>
    %cst_21 = arith.constant 5.000000e-01 : f32
    %34 = vector.broadcast %cst_21 : f32 to vector<32x512xf32>
    %35 = arith.mulf %34, %33 : vector<32x512xf32>
    %cst_22 = arith.constant 5.000000e-01 : f32
    %36 = vector.broadcast %cst_22 : f32 to vector<32x512xf32>
    %37 = arith.mulf %36, %33 : vector<32x512xf32>
    %38 = math.tanh %37 : vector<32x512xf32>
    %cst_23 = arith.constant 1.000000e+00 : f32
    %39 = vector.broadcast %cst_23 : f32 to vector<32x512xf32>
    %40 = arith.addf %39, %38 : vector<32x512xf32>
    %41 = arith.mulf %35, %40 : vector<32x512xf32>
    %42 = arith.truncf %41 : vector<32x512xf32> to vector<32x512xbf16>
    %c0_24 = arith.constant 0 : index
    %c0_25 = arith.constant 0 : index
    %43 = vector.load %arg8[%c0_24, %c0_25] : memref<512x128xbf16, #tpu.memory_space<vmem>>, vector<512x128xbf16>
    %cst_26 = arith.constant dense<0.000000e+00> : vector<32x128xf32>
    %44 = tpu.matmul %42, %43, %cst_26 {dimension_numbers = #tpu.dot_dimension_numbers<[1], [0], [0], [1], [0, 0, 1, 1], [], []>} : vector<32x512xbf16>, vector<512x128xbf16>, vector<32x128xf32> -> vector<32x128xf32>
    %c0_27 = arith.constant 0 : index
    %c0_28 = arith.constant 0 : index
    %45 = vector.load %arg9[%c0_27, %c0_28] : memref<1x128xf32, #tpu.memory_space<vmem>>, vector<1x128xf32>
    %46 = vector.broadcast %45 : vector<1x128xf32> to vector<32x128xf32>
    %47 = arith.addf %44, %46 : vector<32x128xf32>
    %c0_29 = arith.constant 0 : index
    %c0_30 = arith.constant 0 : index
    %48 = vector.load %arg10[%c0_29, %c0_30] : memref<32x128xf32, #tpu.memory_space<vmem>>, vector<32x128xf32>
    tpu.vector_store %arg10[%c0_29, %c0_30], %47 {strides = array<i32>} : memref<32x128xf32, #tpu.memory_space<vmem>>, vector<32x128xf32>,
    return
  }
  func.func @transform_0(%arg0: i32) -> (i32, i32) {
    %c0_i32 = arith.constant 0 : i32
    %c0_i32_0 = arith.constant 0 : i32
    return %arg0, %c0_i32 : i32, i32
  }
  func.func @transform_1(%arg0: i32) -> (i32, i32) {
    %c0_i32 = arith.constant 0 : i32
    %c0_i32_0 = arith.constant 0 : i32
    %c0_i32_1 = arith.constant 0 : i32
    return %c0_i32, %c0_i32_0 : i32, i32
  }
  func.func @transform_2(%arg0: i32) -> (i32, i32) {
    %c0_i32 = arith.constant 0 : i32
    %c0_i32_0 = arith.constant 0 : i32
    %c0_i32_1 = arith.constant 0 : i32
    return %c0_i32, %c0_i32_0 : i32, i32
  }
  func.func @transform_3(%arg0: i32) -> (i32, i32) {
    %c0_i32 = arith.constant 0 : i32
    %c0_i32_0 = arith.constant 0 : i32
    %c0_i32_1 = arith.constant 0 : i32
    return %c0_i32, %c0_i32_0 : i32, i32
  }
  func.func @transform_4(%arg0: i32) -> (i32, i32) {
    %c0_i32 = arith.constant 0 : i32
    %c0_i32_0 = arith.constant 0 : i32
    %c0_i32_1 = arith.constant 0 : i32
    return %c0_i32, %c0_i32_0 : i32, i32
  }
  func.func @transform_5(%arg0: i32) -> (i32, i32) {
    %c0_i32 = arith.constant 0 : i32
    %c0_i32_0 = arith.constant 0 : i32
    %c0_i32_1 = arith.constant 0 : i32
    return %c0_i32, %c0_i32_0 : i32, i32
  }
  func.func @transform_6(%arg0: i32) -> (i32, i32) {
    %c0_i32 = arith.constant 0 : i32
    %c0_i32_0 = arith.constant 0 : i32
    %c0_i32_1 = arith.constant 0 : i32
    return %c0_i32, %c0_i32_0 : i32, i32
  }
  func.func @transform_7(%arg0: i32) -> (i32, i32) {
    %c0_i32 = arith.constant 0 : i32
    %c0_i32_0 = arith.constant 0 : i32
    %c0_i32_1 = arith.constant 0 : i32
    return %c0_i32, %c0_i32_0 : i32, i32
  }
  func.func @transform_8(%arg0: i32) -> (i32, i32) {
    %c0_i32 = arith.constant 0 : i32
    %c0_i32_0 = arith.constant 0 : i32
    %c0_i32_1 = arith.constant 0 : i32
    return %c0_i32, %c0_i32_0 : i32, i32
  }
  func.func @transform_9(%arg0: i32) -> (i32, i32) {
    %c0_i32 = arith.constant 0 : i32
    %c0_i32_0 = arith.constant 0 : i32
    return %arg0, %c0_i32 : i32, i32
  }
}

</mosaic_0001>

<llo_original>
// kernel: text_decoder.1
$region0: #{text_decoder.1}
  #allocation0 [shape = 'u32[]', space=smem, size = 0x4, offset = 0x4, fixed_abs, tag = 'smem constant byte address 0x4 - core index']
  #allocation1 [shape = 'u32[144,128]{1,0:T(1,128)}', space=vmem, size = 0x12000, scoped, tag = 'internal scratch']
  %s0 = inlined_call_operand.vmem [shape: bf16[32,32], index: 0, kind: input, shape index: {}]
  %s1 = inlined_call_operand.vmem [shape: bf16[32,512], index: 1, kind: input, shape index: {}]
  %s2 = inlined_call_operand.vmem [shape: f32[1,512], index: 2, kind: input, shape index: {}]
  %s3 = inlined_call_operand.vmem [shape: bf16[512,512], index: 3, kind: input, shape index: {}]
  %s4 = inlined_call_operand.vmem [shape: f32[1,512], index: 4, kind: input, shape index: {}]
  %s5 = inlined_call_operand.vmem [shape: bf16[512,512], index: 5, kind: input, shape index: {}]
  %s6 = inlined_call_operand.vmem [shape: f32[1,512], index: 6, kind: input, shape index: {}]
  %s7 = inlined_call_operand.vmem [shape: bf16[512,128], index: 7, kind: input, shape index: {}]
  %s8 = inlined_call_operand.vmem [shape: f32[1,128], index: 8, kind: input, shape index: {}]
  %s9 = inlined_call_operand.vmem [shape: f32[32,128], index: 9, kind: output, shape index: {}]
  %s10 = sld [smem:[#allocation0]]
  $region46: #{text_decoder.1} parent=0
    _
  %s12 = ssub.s32 1, %s10
  %s13 = scalar_select 0, %s12, %s10
  // Predicated region
  $region2: #{text_decoder.1} parent=0 // pred_check
    _
  $region3: #{text_decoder.1} parent=0 // pred_check_branch
    %15 = sbr.rel (0) target = $region5
  $region4: #{text_decoder.1} parent=0 // pred_region
    _
  $region5: #{text_decoder.1} parent=0 // pred_fallthru
    _
  // Predicated region
  $region6: #{text_decoder.1} parent=0 // pred_check
    _
  $region7: #{text_decoder.1} parent=0 // pred_check_branch
    %17 = sbr.rel (0) target = $region9
  $region8: #{text_decoder.1} parent=0 // pred_region
    _
  $region9: #{text_decoder.1} parent=0 // pred_fallthru
    _
  // Predicated region
  $region10: #{text_decoder.1} parent=0 // pred_check
    _
  $region11: #{text_decoder.1} parent=0 // pred_check_branch
    %19 = sbr.rel (0) target = $region13
  $region12: #{text_decoder.1} parent=0 // pred_region
    _
  $region13: #{text_decoder.1} parent=0 // pred_fallthru
    _
  // Predicated region
  $region14: #{text_decoder.1} parent=0 // pred_check
    _
  $region15: #{text_decoder.1} parent=0 // pred_check_branch
    %21 = sbr.rel (0) target = $region17
  $region16: #{text_decoder.1} parent=0 // pred_region
    _
  $region17: #{text_decoder.1} parent=0 // pred_fallthru
    _
  // Predicated region
  $region18: #{text_decoder.1} parent=0 // pred_check
    _
  $region19: #{text_decoder.1} parent=0 // pred_check_branch
    %23 = sbr.rel (0) target = $region21
  $region20: #{text_decoder.1} parent=0 // pred_region
    _
  $region21: #{text_decoder.1} parent=0 // pred_fallthru
    _
  // Predicated region
  $region22: #{text_decoder.1} parent=0 // pred_check
    _
  $region23: #{text_decoder.1} parent=0 // pred_check_branch
    %25 = sbr.rel (0) target = $region25
  $region24: #{text_decoder.1} parent=0 // pred_region
    _
  $region25: #{text_decoder.1} parent=0 // pred_fallthru
    _
  // Predicated region
  $region26: #{text_decoder.1} parent=0 // pred_check
    _
  $region27: #{text_decoder.1} parent=0 // pred_check_branch
    %27 = sbr.rel (0) target = $region29
  $region28: #{text_decoder.1} parent=0 // pred_region
    _
  $region29: #{text_decoder.1} parent=0 // pred_fallthru
    _
  // Predicated region
  $region30: #{text_decoder.1} parent=0 // pred_check
    _
  $region31: #{text_decoder.1} parent=0 // pred_check_branch
    %29 = sbr.rel (0) target = $region33
  $region32: #{text_decoder.1} parent=0 // pred_region
    _
  $region33: #{text_decoder.1} parent=0 // pred_fallthru
    _
  // Predicated region
  $region34: #{text_decoder.1} parent=0 // pred_check
    _
  $region35: #{text_decoder.1} parent=0 // pred_check_branch
    %31 = sbr.rel (0) target = $region37
  $region36: #{text_decoder.1} parent=0 // pred_region
    _
  $region37: #{text_decoder.1} parent=0 // pred_fallthru
    _
  %v33 = vld [vmem:[%s0] sm:$0xf]
  %v34 = vld [vmem:[%s0 + $0x4] sm:$0xf]
  %v35 = vld [vmem:[%s0 + $0x8] sm:$0xf]
  %v36 = vld [vmem:[%s0 + $0xc] sm:$0xf]
  %v37 = vld [vmem:[%s1] sm:$0xff]
  %v38 = vld [vmem:[%s1 + $0x8] sm:$0xff]
  %v39 = vld [vmem:[%s1 + $0x10] sm:$0xff]
  %v40 = vld [vmem:[%s1 + $0x18] sm:$0xff]
  %v41 = vld [vmem:[%s1 + $0x20] sm:$0xff]
  %v42 = vld [vmem:[%s1 + $0x28] sm:$0xff]
  %v43 = vld [vmem:[%s1 + $0x30] sm:$0xff]
  %v44 = vld [vmem:[%s1 + $0x38] sm:$0xff]
  %v45 = vld [vmem:[%s2] sm:$0xf]
  %v47 = vlaneseq
  %v48 = vshrl.u32 %v47, 7
  %v49 = vsub.s32 0, %v48
  %v50 = vrot.slane %v45, %v49
  %v51 = vlaneseq
  %v52 = vshrl.u32 %v51, 7
  %v53 = vsub.s32 1, %v52
  %v54 = vrot.slane %v45, %v53
  %v55 = vlaneseq
  %v56 = vshrl.u32 %v55, 7
  %v57 = vsub.s32 2, %v56
  %v58 = vrot.slane %v45, %v57
  %v59 = vlaneseq
  %v60 = vshrl.u32 %v59, 7
  %v61 = vsub.s32 3, %v60
  %v62 = vrot.slane %v45, %v61
  %v71 = vunpack.c.l.b16 %v33
  %v72 = vunpack.c.l.b16 %v34
  %v73 = vunpack.c.l.b16 %v35
  %v74 = vunpack.c.l.b16 %v36
  %v75 = vpack.c.b16 %v72, %v71
  %v76 = vpack.c.b16 %v74, %v73
  %v85 = vunpack.c.l.b16 %v37
  %v86 = vunpack.c.h.b16 %v37
  %v87 = vunpack.c.l.b16 %v38
  %v88 = vunpack.c.h.b16 %v38
  %v89 = vunpack.c.l.b16 %v39
  %v90 = vunpack.c.h.b16 %v39
  %v91 = vunpack.c.l.b16 %v40
  %v92 = vunpack.c.h.b16 %v40
  %v93 = vunpack.c.l.b16 %v41
  %v94 = vunpack.c.h.b16 %v41
  %v95 = vunpack.c.l.b16 %v42
  %v96 = vunpack.c.h.b16 %v42
  %v97 = vunpack.c.l.b16 %v43
  %v98 = vunpack.c.h.b16 %v43
  %v99 = vunpack.c.l.b16 %v44
  %v100 = vunpack.c.h.b16 %v44
  %v101 = vpack.c.b16 %v89, %v85
  %v102 = vpack.c.b16 %v90, %v86
  %v103 = vpack.c.b16 %v91, %v87
  %v104 = vpack.c.b16 %v92, %v88
  %v105 = vpack.c.b16 %v97, %v93
  %v106 = vpack.c.b16 %v98, %v94
  %v107 = vpack.c.b16 %v99, %v95
  %v108 = vpack.c.b16 %v100, %v96
  %vm117 = vcmask 261120
  %v119 = vsel %vm117, %v75, 0
  %v122 = vsel %vm117, %v76, 0
  %124 = vmatprep.subr.bf16.mxu0 %v102
  %125 = vmatpush1.bf16.msra.mxu0 %v101
  %126 = vmatprep.subr.bf16.mxu0 %v106
  %127 = vmatpush1.bf16.msra.mxu0 %v105
  %128 = vmatprep.subr.bf16.mxu0 0
  %129 = vmatpush1.bf16.msra.mxu0 0
  %130 = vmatprep.subr.bf16.mxu0 0
  %131 = vmatpush1.bf16.msra.mxu0 0
  %132 = vmatprep.subr.bf16.mxu0 0
  %133 = vmatpush1.bf16.msra.mxu0 0
  %134 = vmatprep.subr.bf16.mxu0 0
  %135 = vmatpush1.bf16.msra.mxu0 0
  %136 = vmatprep.subr.bf16.mxu0 0
  %137 = vmatpush1.bf16.msra.mxu0 0
  %138 = vmatprep.subr.bf16.mxu0 0
  %139 = vmatpush1.bf16.msra.mxu0 0
  %140 = vmatprep.subr.bf16.mxu0 0
  %141 = vmatpush1.bf16.msra.mxu0 0
  %142 = vmatprep.subr.bf16.mxu0 0
  %143 = vmatpush1.bf16.msra.mxu0 0
  %144 = vmatprep.subr.bf16.mxu0 0
  %145 = vmatpush1.bf16.msra.mxu0 0
  %146 = vmatprep.subr.bf16.mxu0 0
  %147 = vmatpush1.bf16.msra.mxu0 0
  %148 = vmatprep.subr.bf16.mxu0 0
  %149 = vmatpush1.bf16.msra.mxu0 0
  %150 = vmatprep.subr.bf16.mxu0 0
  %151 = vmatpush1.bf16.msra.mxu0 0
  %152 = vmatprep.subr.bf16.mxu0 0
  %153 = vmatpush1.bf16.msra.mxu0 0
  %154 = vmatprep.subr.bf16.mxu0 0
  %155 = vmatpush1.bf16.msra.mxu0 0
  %156 = vmatprep.mubr.bf16.mxu0 0
  %157 = vmatmul.mubr.bf16.gmra.mrb[0].mxu0 %v119
  %v158 = vpop.f32.mrb[0].mxu0
  %v159 = vadd.f32 %v50, %v158
  %v160 = vpop.f32.mrb[0].mxu0
  %v161 = vadd.f32 %v54, %v160
  %v162 = vpop.f32.mrb[0].mxu0
  %v163 = vadd.f32 %v50, %v162
  %v164 = vpop.f32.mrb[0].mxu0
  %v165 = vadd.f32 %v54, %v164
  %166 = vmatprep.mubr.bf16.mxu0 0
  %167 = vmatmul.mubr.bf16.gmra.mrb[0].mxu0 %v122
  %v168 = vpop.f32.mrb[0].mxu0
  %v169 = vadd.f32 %v50, %v168
  %v170 = vpop.f32.mrb[0].mxu0
  %v171 = vadd.f32 %v54, %v170
  %v172 = vpop.f32.mrb[0].mxu0
  %v173 = vadd.f32 %v50, %v172
  %v174 = vpop.f32.mrb[0].mxu0
  %v175 = vadd.f32 %v54, %v174
  %176 = vdwg.mxu0
  %177 = vmatprep.subr.bf16.mxu0 %v104
  %178 = vmatpush1.bf16.msra.mxu0 %v103
  %179 = vmatprep.subr.bf16.mxu0 %v108
  %180 = vmatpush1.bf16.msra.mxu0 %v107
  %181 = vmatprep.subr.bf16.mxu0 0
  %182 = vmatpush1.bf16.msra.mxu0 0
  %183 = vmatprep.subr.bf16.mxu0 0
  %184 = vmatpush1.bf16.msra.mxu0 0
  %185 = vmatprep.subr.bf16.mxu0 0
  %186 = vmatpush1.bf16.msra.mxu0 0
  %187 = vmatprep.subr.bf16.mxu0 0
  %188 = vmatpush1.bf16.msra.mxu0 0
  %189 = vmatprep.subr.bf16.mxu0 0
  %190 = vmatpush1.bf16.msra.mxu0 0
  %191 = vmatprep.subr.bf16.mxu0 0
  %192 = vmatpush1.bf16.msra.mxu0 0
  %193 = vmatprep.subr.bf16.mxu0 0
  %194 = vmatpush1.bf16.msra.mxu0 0
  %195 = vmatprep.subr.bf16.mxu0 0
  %196 = vmatpush1.bf16.msra.mxu0 0
  %197 = vmatprep.subr.bf16.mxu0 0
  %198 = vmatpush1.bf16.msra.mxu0 0
  %199 = vmatprep.subr.bf16.mxu0 0
  %200 = vmatpush1.bf16.msra.mxu0 0
  %201 = vmatprep.subr.bf16.mxu0 0
  %202 = vmatpush1.bf16.msra.mxu0 0
  %203 = vmatprep.subr.bf16.mxu0 0
  %204 = vmatpush1.bf16.msra.mxu0 0
  %205 = vmatprep.subr.bf16.mxu0 0
  %206 = vmatpush1.bf16.msra.mxu0 0
  %207 = vmatprep.subr.bf16.mxu0 0
  %208 = vmatpush1.bf16.msra.mxu0 0
  %209 = vmatprep.mubr.bf16.mxu0 0
  %210 = vmatmul.mubr.bf16.gmra.mrb[0].mxu0 %v119
  %v211 = vpop.f32.mrb[0].mxu0
  %v212 = vadd.f32 %v58, %v211
  %v213 = vpop.f32.mrb[0].mxu0
  %v214 = vadd.f32 %v62, %v213
  %v215 = vpop.f32.mrb[0].mxu0
  %v216 = vadd.f32 %v58, %v215
  %v217 = vpop.f32.mrb[0].mxu0
  %v218 = vadd.f32 %v62, %v217
  %219 = vmatprep.mubr.bf16.mxu0 0
  %220 = vmatmul.mubr.bf16.gmra.mrb[0].mxu0 %v122
  %v221 = vpop.f32.mrb[0].mxu0
  %v222 = vadd.f32 %v58, %v221
  %v223 = vpop.f32.mrb[0].mxu0
  %v224 = vadd.f32 %v62, %v223
  %v225 = vpop.f32.mrb[0].mxu0
  %v226 = vadd.f32 %v58, %v225
  %v227 = vpop.f32.mrb[0].mxu0
  %v228 = vadd.f32 %v62, %v227
  %229 = vdwg.mxu0
  %v230 = vmul.f32 %v159, 0.5
  %v231 = vmul.f32 %v161, 0.5
  %v232 = vmul.f32 %v212, 0.5
  %v233 = vmul.f32 %v214, 0.5
  %v234 = vmul.f32 %v163, 0.5
  %v235 = vmul.f32 %v165, 0.5
  %v236 = vmul.f32 %v216, 0.5
  %v237 = vmul.f32 %v218, 0.5
  %v238 = vmul.f32 %v169, 0.5
  %v239 = vmul.f32 %v171, 0.5
  %v240 = vmul.f32 %v222, 0.5
  %v241 = vmul.f32 %v224, 0.5
  %v242 = vmul.f32 %v173, 0.5
  %v243 = vmul.f32 %v175, 0.5
  %v244 = vmul.f32 %v226, 0.5
  %v245 = vmul.f32 %v228, 0.5
  %v246 = vtanh.pop %v230
  %v247 = vtanh.pop %v231
  %v248 = vtanh.pop %v232
  %v249 = vtanh.pop %v233
  %v250 = vtanh.pop %v234
  %v251 = vtanh.pop %v235
  %v252 = vtanh.pop %v236
  %v253 = vtanh.pop %v237
  %v254 = vtanh.pop %v238
  %v255 = vtanh.pop %v239
  %v256 = vtanh.pop %v240
  %v257 = vtanh.pop %v241
  %v258 = vtanh.pop %v242
  %v259 = vtanh.pop %v243
  %v260 = vtanh.pop %v244
  %v261 = vtanh.pop %v245
  %v262 = vadd.f32 %v246, 1.0
  %v263 = vadd.f32 %v247, 1.0
  %v264 = vadd.f32 %v248, 1.0
  %v265 = vadd.f32 %v249, 1.0
  %v266 = vadd.f32 %v250, 1.0
  %v267 = vadd.f32 %v251, 1.0
  %v268 = vadd.f32 %v252, 1.0
  %v269 = vadd.f32 %v253, 1.0
  %v270 = vadd.f32 %v254, 1.0
  %v271 = vadd.f32 %v255, 1.0
  %v272 = vadd.f32 %v256, 1.0
  %v273 = vadd.f32 %v257, 1.0
  %v274 = vadd.f32 %v258, 1.0
  %v275 = vadd.f32 %v259, 1.0
  %v276 = vadd.f32 %v260, 1.0
  %v277 = vadd.f32 %v261, 1.0
  %v278 = vmul.f32 %v230, %v262
  %v279 = vmul.f32 %v231, %v263
  %v280 = vmul.f32 %v232, %v264
  %v281 = vmul.f32 %v233, %v265
  %v282 = vmul.f32 %v234, %v266
  %v283 = vmul.f32 %v235, %v267
  %v284 = vmul.f32 %v236, %v268
  %v285 = vmul.f32 %v237, %v269
  %v286 = vmul.f32 %v238, %v270
  %v287 = vmul.f32 %v239, %v271
  %v288 = vmul.f32 %v240, %v272
  %v289 = vmul.f32 %v241, %v273
  %v290 = vmul.f32 %v242, %v274
  %v291 = vmul.f32 %v243, %v275
  %v292 = vmul.f32 %v244, %v276
  %v293 = vmul.f32 %v245, %v277
  %v294 = vpack.c.bf16 %v282, %v278
  %v295 = vpack.c.bf16 %v283, %v279
  %v296 = vpack.c.bf16 %v284, %v280
  %v297 = vpack.c.bf16 %v285, %v281
  %v298 = vpack.c.bf16 %v290, %v286
  %v299 = vpack.c.bf16 %v291, %v287
  %v300 = vpack.c.bf16 %v292, %v288
  %v301 = vpack.c.bf16 %v293, %v289
  %v302 = vld [vmem:[%s3] sm:$0xff]
  %v303 = vld [vmem:[%s3 + $0x8] sm:$0xff]
  %v304 = vld [vmem:[%s3 + $0x10] sm:$0xff]
  %v305 = vld [vmem:[%s3 + $0x18] sm:$0xff]
  %v306 = vld [vmem:[%s3 + $0x20] sm:$0xff]
  %v307 = vld [vmem:[%s3 + $0x28] sm:$0xff]
  %v308 = vld [vmem:[%s3 + $0x30] sm:$0xff]
  %v309 = vld [vmem:[%s3 + $0x38] sm:$0xff]
  %v310 = vld [vmem:[%s3 + $0x40] sm:$0xff]
  %v311 = vld [vmem:[%s3 + $0x48] sm:$0xff]
  %v312 = vld [vmem:[%s3 + $0x50] sm:$0xff]
  %v313 = vld [vmem:[%s3 + $0x58] sm:$0xff]
  %v314 = vld [vmem:[%s3 + $0x60] sm:$0xff]
  %v315 = vld [vmem:[%s3 + $0x68] sm:$0xff]
  %v316 = vld [vmem:[%s3 + $0x70] sm:$0xff]
  %v317 = vld [vmem:[%s3 + $0x78] sm:$0xff]
  %v318 = vld [vmem:[%s3 + $0x80] sm:$0xff]
  %v319 = vld [vmem:[%s3 + $0x88] sm:$0xff]
  %v320 = vld [vmem:[%s3 + $0x90] sm:$0xff]
  %v321 = vld [vmem:[%s3 + $0x98] sm:$0xff]
  %v322 = vld [vmem:[%s3 + $0xa0] sm:$0xff]
  %v323 = vld [vmem:[%s3 + $0xa8] sm:$0xff]
  %v324 = vld [vmem:[%s3 + $0xb0] sm:$0xff]
  %v325 = vld [vmem:[%s3 + $0xb8] sm:$0xff]
  %v326 = vld [vmem:[%s3 + $0xc0] sm:$0xff]
  %v327 = vld [vmem:[%s3 + $0xc8] sm:$0xff]
  %v328 = vld [vmem:[%s3 + $0xd0] sm:$0xff]
  %v329 = vld [vmem:[%s3 + $0xd8] sm:$0xff]
  %v330 = vld [vmem:[%s3 + $0xe0] sm:$0xff]
  %v331 = vld [vmem:[%s3 + $0xe8] sm:$0xff]
  %v332 = vld [vmem:[%s3 + $0xf0] sm:$0xff]
  %v333 = vld [vmem:[%s3 + $0xf8] sm:$0xff]
  %v334 = vld [vmem:[%s3 + $0x100] sm:$0xff]
  %v335 = vld [vmem:[%s3 + $0x108] sm:$0xff]
  %v336 = vld [vmem:[%s3 + $0x110] sm:$0xff]
  %v337 = vld [vmem:[%s3 + $0x118] sm:$0xff]
  %v338 = vld [vmem:[%s3 + $0x120] sm:$0xff]
  %v339 = vld [vmem:[%s3 + $0x128] sm:$0xff]
  %v340 = vld [vmem:[%s3 + $0x130] sm:$0xff]
  %v341 = vld [vmem:[%s3 + $0x138] sm:$0xff]
  %v342 = vld [vmem:[%s3 + $0x140] sm:$0xff]
  %v343 = vld [vmem:[%s3 + $0x148] sm:$0xff]
  %v344 = vld [vmem:[%s3 + $0x150] sm:$0xff]
  %v345 = vld [vmem:[%s3 + $0x158] sm:$0xff]
  %v346 = vld [vmem:[%s3 + $0x160] sm:$0xff]
  %v347 = vld [vmem:[%s3 + $0x168] sm:$0xff]
  %v348 = vld [vmem:[%s3 + $0x170] sm:$0xff]
  %v349 = vld [vmem:[%s3 + $0x178] sm:$0xff]
  %v350 = vld [vmem:[%s3 + $0x180] sm:$0xff]
  %v351 = vld [vmem:[%s3 + $0x188] sm:$0xff]
  %v352 = vld [vmem:[%s3 + $0x190] sm:$0xff]
  %v353 = vld [vmem:[%s3 + $0x198] sm:$0xff]
  %v354 = vld [vmem:[%s3 + $0x1a0] sm:$0xff]
  %v355 = vld [vmem:[%s3 + $0x1a8] sm:$0xff]
  %v356 = vld [vmem:[%s3 + $0x1b0] sm:$0xff]
  %v357 = vld [vmem:[%s3 + $0x1b8] sm:$0xff]
  %v358 = vld [vmem:[%s3 + $0x1c0] sm:$0xff]
  %v359 = vld [vmem:[%s3 + $0x1c8] sm:$0xff]
  %v360 = vld [vmem:[%s3 + $0x1d0] sm:$0xff]
  %v361 = vld [vmem:[%s3 + $0x1d8] sm:$0xff]
  %v362 = vld [vmem:[%s3 + $0x1e0] sm:$0xff]
  %v363 = vld [vmem:[%s3 + $0x1e8] sm:$0xff]
  %v364 = vld [vmem:[%s3 + $0x1f0] sm:$0xff]
  %v365 = vld [vmem:[%s3 + $0x1f8] sm:$0xff]
  %v366 = vld [vmem:[%s3 + $0x200] sm:$0xff]
  %v367 = vld [vmem:[%s3 + $0x208] sm:$0xff]
  %v368 = vld [vmem:[%s3 + $0x210] sm:$0xff]
  %v369 = vld [vmem:[%s3 + $0x218] sm:$0xff]
  %v370 = vld [vmem:[%s3 + $0x220] sm:$0xff]
  %v371 = vld [vmem:[%s3 + $0x228] sm:$0xff]
  %v372 = vld [vmem:[%s3 + $0x230] sm:$0xff]
  %v373 = vld [vmem:[%s3 + $0x238] sm:$0xff]
  %v374 = vld [vmem:[%s3 + $0x240] sm:$0xff]
  %v375 = vld [vmem:[%s3 + $0x248] sm:$0xff]
  %v376 = vld [vmem:[%s3 + $0x250] sm:$0xff]
  %v377 = vld [vmem:[%s3 + $0x258] sm:$0xff]
  %v378 = vld [vmem:[%s3 + $0x260] sm:$0xff]
  %v379 = vld [vmem:[%s3 + $0x268] sm:$0xff]
  %v380 = vld [vmem:[%s3 + $0x270] sm:$0xff]
  %v381 = vld [vmem:[%s3 + $0x278] sm:$0xff]
  %v382 = vld [vmem:[%s3 + $0x280] sm:$0xff]
  %v383 = vld [vmem:[%s3 + $0x288] sm:$0xff]
  %v384 = vld [vmem:[%s3 + $0x290] sm:$0xff]
  %v385 = vld [vmem:[%s3 + $0x298] sm:$0xff]
  %v386 = vld [vmem:[%s3 + $0x2a0] sm:$0xff]
  %v387 = vld [vmem:[%s3 + $0x2a8] sm:$0xff]
  %v388 = vld [vmem:[%s3 + $0x2b0] sm:$0xff]
  %v389 = vld [vmem:[%s3 + $0x2b8] sm:$0xff]
  %v390 = vld [vmem:[%s3 + $0x2c0] sm:$0xff]
  %v391 = vld [vmem:[%s3 + $0x2c8] sm:$0xff]
  %v392 = vld [vmem:[%s3 + $0x2d0] sm:$0xff]
  %v393 = vld [vmem:[%s3 + $0x2d8] sm:$0xff]
  %v394 = vld [vmem:[%s3 + $0x2e0] sm:$0xff]
  %v395 = vld [vmem:[%s3 + $0x2e8] sm:$0xff]
  %v396 = vld [vmem:[%s3 + $0x2f0] sm:$0xff]
  %v397 = vld [vmem:[%s3 + $0x2f8] sm:$0xff]
  %v398 = vld [vmem:[%s3 + $0x300] sm:$0xff]
  %v399 = vld [vmem:[%s3 + $0x308] sm:$0xff]
  %v400 = vld [vmem:[%s3 + $0x310] sm:$0xff]
  %v401 = vld [vmem:[%s3 + $0x318] sm:$0xff]
  %v402 = vld [vmem:[%s3 + $0x320] sm:$0xff]
  %v403 = vld [vmem:[%s3 + $0x328] sm:$0xff]
  %v404 = vld [vmem:[%s3 + $0x330] sm:$0xff]
  %v405 = vld [vmem:[%s3 + $0x338] sm:$0xff]
  %v406 = vld [vmem:[%s3 + $0x340] sm:$0xff]
  %v407 = vld [vmem:[%s3 + $0x348] sm:$0xff]
  %v408 = vld [vmem:[%s3 + $0x350] sm:$0xff]
  %v409 = vld [vmem:[%s3 + $0x358] sm:$0xff]
  %v410 = vld [vmem:[%s3 + $0x360] sm:$0xff]
  %v411 = vld [vmem:[%s3 + $0x368] sm:$0xff]
  %v412 = vld [vmem:[%s3 + $0x370] sm:$0xff]
  %v413 = vld [vmem:[%s3 + $0x378] sm:$0xff]
  %v414 = vld [vmem:[%s3 + $0x380] sm:$0xff]
  %v415 = vld [vmem:[%s3 + $0x388] sm:$0xff]
  %v416 = vld [vmem:[%s3 + $0x390] sm:$0xff]
  %v417 = vld [vmem:[%s3 + $0x398] sm:$0xff]
  %v418 = vld [vmem:[%s3 + $0x3a0] sm:$0xff]
  %v419 = vld [vmem:[%s3 + $0x3a8] sm:$0xff]
  %v420 = vld [vmem:[%s3 + $0x3b0] sm:$0xff]
  %v421 = vld [vmem:[%s3 + $0x3b8] sm:$0xff]
  %v422 = vld [vmem:[%s3 + $0x3c0] sm:$0xff]
  %v423 = vld [vmem:[%s3 + $0x3c8] sm:$0xff]
  %v424 = vld [vmem:[%s3 + $0x3d0] sm:$0xff]
  %v425 = vld [vmem:[%s3 + $0x3d8] sm:$0xff]
  %v426 = vld [vmem:[%s3 + $0x3e0] sm:$0xff]
  %v427 = vld [vmem:[%s3 + $0x3e8] sm:$0xff]
  %v428 = vld [vmem:[%s3 + $0x3f0] sm:$0xff]
  %v429 = vld [vmem:[%s3 + $0x3f8] sm:$0xff]
  %v430 = vld [vmem:[%s4] sm:$0xf]
  %v432 = vlaneseq
  %v433 = vshrl.u32 %v432, 7
  %v434 = vsub.s32 0, %v433
  %v435 = vrot.slane %v430, %v434
  %v436 = vlaneseq
  %v437 = vshrl.u32 %v436, 7
  %v438 = vsub.s32 1, %v437
  %v439 = vrot.slane %v430, %v438
  %v440 = vlaneseq
  %v441 = vshrl.u32 %v440, 7
  %v442 = vsub.s32 2, %v441
  %v443 = vrot.slane %v430, %v442
  %v444 = vlaneseq
  %v445 = vshrl.u32 %v444, 7
  %v446 = vsub.s32 3, %v445
  %v447 = vrot.slane %v430, %v446
  %v580 = vunpack.c.l.b16 %v302
  %v581 = vunpack.c.h.b16 %v302
  %v582 = vunpack.c.l.b16 %v303
  %v583 = vunpack.c.h.b16 %v303
  %v584 = vunpack.c.l.b16 %v304
  %v585 = vunpack.c.h.b16 %v304
  %v586 = vunpack.c.l.b16 %v305
  %v587 = vunpack.c.h.b16 %v305
  %v588 = vunpack.c.l.b16 %v306
  %v589 = vunpack.c.h.b16 %v306
  %v590 = vunpack.c.l.b16 %v307
  %v591 = vunpack.c.h.b16 %v307
  %v592 = vunpack.c.l.b16 %v308
  %v593 = vunpack.c.h.b16 %v308
  %v594 = vunpack.c.l.b16 %v309
  %v595 = vunpack.c.h.b16 %v309
  %v596 = vunpack.c.l.b16 %v310
  %v597 = vunpack.c.h.b16 %v310
  %v598 = vunpack.c.l.b16 %v311
  %v599 = vunpack.c.h.b16 %v311
  %v600 = vunpack.c.l.b16 %v312
  %v601 = vunpack.c.h.b16 %v312
  %v602 = vunpack.c.l.b16 %v313
  %v603 = vunpack.c.h.b16 %v313
  %v604 = vunpack.c.l.b16 %v314
  %v605 = vunpack.c.h.b16 %v314
  %v606 = vunpack.c.l.b16 %v315
  %v607 = vunpack.c.h.b16 %v315
  %v608 = vunpack.c.l.b16 %v316
  %v609 = vunpack.c.h.b16 %v316
  %v610 = vunpack.c.l.b16 %v317
  %v611 = vunpack.c.h.b16 %v317
  %v612 = vunpack.c.l.b16 %v318
  %v613 = vunpack.c.h.b16 %v318
  %v614 = vunpack.c.l.b16 %v319
  %v615 = vunpack.c.h.b16 %v319
  %v616 = vunpack.c.l.b16 %v320
  %v617 = vunpack.c.h.b16 %v320
  %v618 = vunpack.c.l.b16 %v321
  %v619 = vunpack.c.h.b16 %v321
  %v620 = vunpack.c.l.b16 %v322
  %v621 = vunpack.c.h.b16 %v322
  %v622 = vunpack.c.l.b16 %v323
  %v623 = vunpack.c.h.b16 %v323
  %v624 = vunpack.c.l.b16 %v324
  %v625 = vunpack.c.h.b16 %v324
  %v626 = vunpack.c.l.b16 %v325
  %v627 = vunpack.c.h.b16 %v325
  %v628 = vunpack.c.l.b16 %v326
  %v629 = vunpack.c.h.b16 %v326
  %v630 = vunpack.c.l.b16 %v327
  %v631 = vunpack.c.h.b16 %v327
  %v632 = vunpack.c.l.b16 %v328
  %v633 = vunpack.c.h.b16 %v328
  %v634 = vunpack.c.l.b16 %v329
  %v635 = vunpack.c.h.b16 %v329
  %v636 = vunpack.c.l.b16 %v330
  %v637 = vunpack.c.h.b16 %v330
  %v638 = vunpack.c.l.b16 %v331
  %v639 = vunpack.c.h.b16 %v331
  %v640 = vunpack.c.l.b16 %v332
  %v641 = vunpack.c.h.b16 %v332
  %v642 = vunpack.c.l.b16 %v333
  %v643 = vunpack.c.h.b16 %v333
  %v644 = vunpack.c.l.b16 %v334
  %v645 = vunpack.c.h.b16 %v334
  %v646 = vunpack.c.l.b16 %v335
  %v647 = vunpack.c.h.b16 %v335
  %v648 = vunpack.c.l.b16 %v336
  %v649 = vunpack.c.h.b16 %v336
  %v650 = vunpack.c.l.b16 %v337
  %v651 = vunpack.c.h.b16 %v337
  %v652 = vunpack.c.l.b16 %v338
  %v653 = vunpack.c.h.b16 %v338
  %v654 = vunpack.c.l.b16 %v339
  %v655 = vunpack.c.h.b16 %v339
  %v656 = vunpack.c.l.b16 %v340
  %v657 = vunpack.c.h.b16 %v340
  %v658 = vunpack.c.l.b16 %v341
  %v659 = vunpack.c.h.b16 %v341
  %v660 = vunpack.c.l.b16 %v342
  %v661 = vunpack.c.h.b16 %v342
  %v662 = vunpack.c.l.b16 %v343
  %v663 = vunpack.c.h.b16 %v343
  %v664 = vunpack.c.l.b16 %v344
  %v665 = vunpack.c.h.b16 %v344
  %v666 = vunpack.c.l.b16 %v345
  %v667 = vunpack.c.h.b16 %v345
  %v668 = vunpack.c.l.b16 %v346
  %v669 = vunpack.c.h.b16 %v346
  %v670 = vunpack.c.l.b16 %v347
  %v671 = vunpack.c.h.b16 %v347
  %v672 = vunpack.c.l.b16 %v348
  %v673 = vunpack.c.h.b16 %v348
  %v674 = vunpack.c.l.b16 %v349
  %v675 = vunpack.c.h.b16 %v349
  %v676 = vunpack.c.l.b16 %v350
  %v677 = vunpack.c.h.b16 %v350
  %v678 = vunpack.c.l.b16 %v351
  %v679 = vunpack.c.h.b16 %v351
  %v680 = vunpack.c.l.b16 %v352
  %v681 = vunpack.c.h.b16 %v352
  %v682 = vunpack.c.l.b16 %v353
  %v683 = vunpack.c.h.b16 %v353
  %v684 = vunpack.c.l.b16 %v354
  %v685 = vunpack.c.h.b16 %v354
  %v686 = vunpack.c.l.b16 %v355
  %v687 = vunpack.c.h.b16 %v355
  %v688 = vunpack.c.l.b16 %v356
  %v689 = vunpack.c.h.b16 %v356
  %v690 = vunpack.c.l.b16 %v357
  %v691 = vunpack.c.h.b16 %v357
  %v692 = vunpack.c.l.b16 %v358
  %v693 = vunpack.c.h.b16 %v358
  %v694 = vunpack.c.l.b16 %v359
  %v695 = vunpack.c.h.b16 %v359
  %v696 = vunpack.c.l.b16 %v360
  %v697 = vunpack.c.h.b16 %v360
  %v698 = vunpack.c.l.b16 %v361
  %v699 = vunpack.c.h.b16 %v361
  %v700 = vunpack.c.l.b16 %v362
  %v701 = vunpack.c.h.b16 %v362
  %v702 = vunpack.c.l.b16 %v363
  %v703 = vunpack.c.h.b16 %v363
  %v704 = vunpack.c.l.b16 %v364
  %v705 = vunpack.c.h.b16 %v364
  %v706 = vunpack.c.l.b16 %v365
  %v707 = vunpack.c.h.b16 %v365
  %v708 = vunpack.c.l.b16 %v366
  %v709 = vunpack.c.h.b16 %v366
  %v710 = vunpack.c.l.b16 %v367
  %v711 = vunpack.c.h.b16 %v367
  %v712 = vunpack.c.l.b16 %v368
  %v713 = vunpack.c.h.b16 %v368
  %v714 = vunpack.c.l.b16 %v369
  %v715 = vunpack.c.h.b16 %v369
  %v716 = vunpack.c.l.b16 %v370
  %v717 = vunpack.c.h.b16 %v370
  %v718 = vunpack.c.l.b16 %v371
  %v719 = vunpack.c.h.b16 %v371
  %v720 = vunpack.c.l.b16 %v372
  %v721 = vunpack.c.h.b16 %v372
  %v722 = vunpack.c.l.b16 %v373
  %v723 = vunpack.c.h.b16 %v373
  %v724 = vunpack.c.l.b16 %v374
  %v725 = vunpack.c.h.b16 %v374
  %v726 = vunpack.c.l.b16 %v375
  %v727 = vunpack.c.h.b16 %v375
  %v728 = vunpack.c.l.b16 %v376
  %v729 = vunpack.c.h.b16 %v376
  %v730 = vunpack.c.l.b16 %v377
  %v731 = vunpack.c.h.b16 %v377
  %v732 = vunpack.c.l.b16 %v378
  %v733 = vunpack.c.h.b16 %v378
  %v734 = vunpack.c.l.b16 %v379
  %v735 = vunpack.c.h.b16 %v379
  %v736 = vunpack.c.l.b16 %v380
  %v737 = vunpack.c.h.b16 %v380
  %v738 = vunpack.c.l.b16 %v381
  %v739 = vunpack.c.h.b16 %v381
  %v740 = vunpack.c.l.b16 %v382
  %v741 = vunpack.c.h.b16 %v382
  %v742 = vunpack.c.l.b16 %v383
  %v743 = vunpack.c.h.b16 %v383
  %v744 = vunpack.c.l.b16 %v384
  %v745 = vunpack.c.h.b16 %v384
  %v746 = vunpack.c.l.b16 %v385
  %v747 = vunpack.c.h.b16 %v385
  %v748 = vunpack.c.l.b16 %v386
  %v749 = vunpack.c.h.b16 %v386
  %v750 = vunpack.c.l.b16 %v387
  %v751 = vunpack.c.h.b16 %v387
  %v752 = vunpack.c.l.b16 %v388
  %v753 = vunpack.c.h.b16 %v388
  %v754 = vunpack.c.l.b16 %v389
  %v755 = vunpack.c.h.b16 %v389
  %v756 = vunpack.c.l.b16 %v390
  %v757 = vunpack.c.h.b16 %v390
  %v758 = vunpack.c.l.b16 %v391
  %v759 = vunpack.c.h.b16 %v391
  %v760 = vunpack.c.l.b16 %v392
  %v761 = vunpack.c.h.b16 %v392
  %v762 = vunpack.c.l.b16 %v393
  %v763 = vunpack.c.h.b16 %v393
  %v764 = vunpack.c.l.b16 %v394
  %v765 = vunpack.c.h.b16 %v394
  %v766 = vunpack.c.l.b16 %v395
  %v767 = vunpack.c.h.b16 %v395
  %v768 = vunpack.c.l.b16 %v396
  %v769 = vunpack.c.h.b16 %v396
  %v770 = vunpack.c.l.b16 %v397
  %v771 = vunpack.c.h.b16 %v397
  %v772 = vunpack.c.l.b16 %v398
  %v773 = vunpack.c.h.b16 %v398
  %v774 = vunpack.c.l.b16 %v399
  %v775 = vunpack.c.h.b16 %v399
  %v776 = vunpack.c.l.b16 %v400
  %v777 = vunpack.c.h.b16 %v400
  %v778 = vunpack.c.l.b16 %v401
  %v779 = vunpack.c.h.b16 %v401
  %v780 = vunpack.c.l.b16 %v402
  %v781 = vunpack.c.h.b16 %v402
  %v782 = vunpack.c.l.b16 %v403
  %v783 = vunpack.c.h.b16 %v403
  %v784 = vunpack.c.l.b16 %v404
  %v785 = vunpack.c.h.b16 %v404
  %v786 = vunpack.c.l.b16 %v405
  %v787 = vunpack.c.h.b16 %v405
  %v788 = vunpack.c.l.b16 %v406
  %v789 = vunpack.c.h.b16 %v406
  %v790 = vunpack.c.l.b16 %v407
  %v791 = vunpack.c.h.b16 %v407
  %v792 = vunpack.c.l.b16 %v408
  %v793 = vunpack.c.h.b16 %v408
  %v794 = vunpack.c.l.b16 %v409
  %v795 = vunpack.c.h.b16 %v409
  %v796 = vunpack.c.l.b16 %v410
  %v797 = vunpack.c.h.b16 %v410
  %v798 = vunpack.c.l.b16 %v411
  %v799 = vunpack.c.h.b16 %v411
  %v800 = vunpack.c.l.b16 %v412
  %v801 = vunpack.c.h.b16 %v412
  %v802 = vunpack.c.l.b16 %v413
  %v803 = vunpack.c.h.b16 %v413
  %v804 = vunpack.c.l.b16 %v414
  %v805 = vunpack.c.h.b16 %v414
  %v806 = vunpack.c.l.b16 %v415
  %v807 = vunpack.c.h.b16 %v415
  %v808 = vunpack.c.l.b16 %v416
  %v809 = vunpack.c.h.b16 %v416
  %v810 = vunpack.c.l.b16 %v417
  %v811 = vunpack.c.h.b16 %v417
  %v812 = vunpack.c.l.b16 %v418
  %v813 = vunpack.c.h.b16 %v418
  %v814 = vunpack.c.l.b16 %v419
  %v815 = vunpack.c.h.b16 %v419
  %v816 = vunpack.c.l.b16 %v420
  %v817 = vunpack.c.h.b16 %v420
  %v818 = vunpack.c.l.b16 %v421
  %v819 = vunpack.c.h.b16 %v421
  %v820 = vunpack.c.l.b16 %v422
  %v821 = vunpack.c.h.b16 %v422
  %v822 = vunpack.c.l.b16 %v423
  %v823 = vunpack.c.h.b16 %v423
  %v824 = vunpack.c.l.b16 %v424
  %v825 = vunpack.c.h.b16 %v424
  %v826 = vunpack.c.l.b16 %v425
  %v827 = vunpack.c.h.b16 %v425
  %v828 = vunpack.c.l.b16 %v426
  %v829 = vunpack.c.h.b16 %v426
  %v830 = vunpack.c.l.b16 %v427
  %v831 = vunpack.c.h.b16 %v427
  %v832 = vunpack.c.l.b16 %v428
  %v833 = vunpack.c.h.b16 %v428
  %v834 = vunpack.c.l.b16 %v429
  %v835 = vunpack.c.h.b16 %v429
  %v836 = vpack.c.b16 %v584, %v580
  %v837 = vpack.c.b16 %v585, %v581
  %v838 = vpack.c.b16 %v586, %v582
  %v839 = vpack.c.b16 %v587, %v583
  %v840 = vpack.c.b16 %v592, %v588
  %v841 = vpack.c.b16 %v593, %v589
  %v842 = vpack.c.b16 %v594, %v590
  %v843 = vpack.c.b16 %v595, %v591
  %v844 = vpack.c.b16 %v600, %v596
  %v845 = vpack.c.b16 %v601, %v597
  %v846 = vpack.c.b16 %v602, %v598
  %v847 = vpack.c.b16 %v603, %v599
  %v848 = vpack.c.b16 %v608, %v604
  %v849 = vpack.c.b16 %v609, %v605
  %v850 = vpack.c.b16 %v610, %v606
  %v851 = vpack.c.b16 %v611, %v607
  %v852 = vpack.c.b16 %v616, %v612
  %v853 = vpack.c.b16 %v617, %v613
  %v854 = vpack.c.b16 %v618, %v614
  %v855 = vpack.c.b16 %v619, %v615
  %v856 = vpack.c.b16 %v624, %v620
  %v857 = vpack.c.b16 %v625, %v621
  %v858 = vpack.c.b16 %v626, %v622
  %v859 = vpack.c.b16 %v627, %v623
  %v860 = vpack.c.b16 %v632, %v628
  %v861 = vpack.c.b16 %v633, %v629
  %v862 = vpack.c.b16 %v634, %v630
  %v863 = vpack.c.b16 %v635, %v631
  %v864 = vpack.c.b16 %v640, %v636
  %v865 = vpack.c.b16 %v641, %v637
  %v866 = vpack.c.b16 %v642, %v638
  %v867 = vpack.c.b16 %v643, %v639
  %v868 = vpack.c.b16 %v648, %v644
  %v869 = vpack.c.b16 %v649, %v645
  %v870 = vpack.c.b16 %v650, %v646
  %v871 = vpack.c.b16 %v651, %v647
  %v872 = vpack.c.b16 %v656, %v652
  %v873 = vpack.c.b16 %v657, %v653
  %v874 = vpack.c.b16 %v658, %v654
  %v875 = vpack.c.b16 %v659, %v655
  %v876 = vpack.c.b16 %v664, %v660
  %v877 = vpack.c.b16 %v665, %v661
  %v878 = vpack.c.b16 %v666, %v662
  %v879 = vpack.c.b16 %v667, %v663
  %v880 = vpack.c.b16 %v672, %v668
  %v881 = vpack.c.b16 %v673, %v669
  %v882 = vpack.c.b16 %v674, %v670
  %v883 = vpack.c.b16 %v675, %v671
  %v884 = vpack.c.b16 %v680, %v676
  %v885 = vpack.c.b16 %v681, %v677
  %v886 = vpack.c.b16 %v682, %v678
  %v887 = vpack.c.b16 %v683, %v679
  %v888 = vpack.c.b16 %v688, %v684
  %v889 = vpack.c.b16 %v689, %v685
  %v890 = vpack.c.b16 %v690, %v686
  %v891 = vpack.c.b16 %v691, %v687
  %v892 = vpack.c.b16 %v696, %v692
  %v893 = vpack.c.b16 %v697, %v693
  %v894 = vpack.c.b16 %v698, %v694
  %v895 = vpack.c.b16 %v699, %v695
  %v896 = vpack.c.b16 %v704, %v700
  %v897 = vpack.c.b16 %v705, %v701
  %v898 = vpack.c.b16 %v706, %v702
  %v899 = vpack.c.b16 %v707, %v703
  %v900 = vpack.c.b16 %v712, %v708
  %v901 = vpack.c.b16 %v713, %v709
  %v902 = vpack.c.b16 %v714, %v710
  %v903 = vpack.c.b16 %v715, %v711
  %v904 = vpack.c.b16 %v720, %v716
  %v905 = vpack.c.b16 %v721, %v717
  %v906 = vpack.c.b16 %v722, %v718
  %v907 = vpack.c.b16 %v723, %v719
  %v908 = vpack.c.b16 %v728, %v724
  %v909 = vpack.c.b16 %v729, %v725
  %v910 = vpack.c.b16 %v730, %v726
  %v911 = vpack.c.b16 %v731, %v727
  %v912 = vpack.c.b16 %v736, %v732
  %v913 = vpack.c.b16 %v737, %v733
  %v914 = vpack.c.b16 %v738, %v734
  %v915 = vpack.c.b16 %v739, %v735
  %v916 = vpack.c.b16 %v744, %v740
  %v917 = vpack.c.b16 %v745, %v741
  %v918 = vpack.c.b16 %v746, %v742
  %v919 = vpack.c.b16 %v747, %v743
  %v920 = vpack.c.b16 %v752, %v748
  %v921 = vpack.c.b16 %v753, %v749
  %v922 = vpack.c.b16 %v754, %v750
  %v923 = vpack.c.b16 %v755, %v751
  %v924 = vpack.c.b16 %v760, %v756
  %v925 = vpack.c.b16 %v761, %v757
  %v926 = vpack.c.b16 %v762, %v758
  %v927 = vpack.c.b16 %v763, %v759
  %v928 = vpack.c.b16 %v768, %v764
  %v929 = vpack.c.b16 %v769, %v765
  %v930 = vpack.c.b16 %v770, %v766
  %v931 = vpack.c.b16 %v771, %v767
  %v932 = vpack.c.b16 %v776, %v772
  %v933 = vpack.c.b16 %v777, %v773
  %v934 = vpack.c.b16 %v778, %v774
  %v935 = vpack.c.b16 %v779, %v775
  %v936 = vpack.c.b16 %v784, %v780
  %v937 = vpack.c.b16 %v785, %v781
  %v938 = vpack.c.b16 %v786, %v782
  %v939 = vpack.c.b16 %v787, %v783
  %v940 = vpack.c.b16 %v792, %v788
  %v941 = vpack.c.b16 %v793, %v789
  %v942 = vpack.c.b16 %v794, %v790
  %v943 = vpack.c.b16 %v795, %v791
  %v944 = vpack.c.b16 %v800, %v796
  %v945 = vpack.c.b16 %v801, %v797
  %v946 = vpack.c.b16 %v802, %v798
  %v947 = vpack.c.b16 %v803, %v799
  %v948 = vpack.c.b16 %v808, %v804
  %v949 = vpack.c.b16 %v809, %v805
  %v950 = vpack.c.b16 %v810, %v806
  %v951 = vpack.c.b16 %v811, %v807
  %v952 = vpack.c.b16 %v816, %v812
  %v953 = vpack.c.b16 %v817, %v813
  %v954 = vpack.c.b16 %v818, %v814
  %v955 = vpack.c.b16 %v819, %v815
  %v956 = vpack.c.b16 %v824, %v820
  %v957 = vpack.c.b16 %v825, %v821
  %v958 = vpack.c.b16 %v826, %v822
  %v959 = vpack.c.b16 %v827, %v823
  %v960 = vpack.c.b16 %v832, %v828
  %v961 = vpack.c.b16 %v833, %v829
  %v962 = vpack.c.b16 %v834, %v830
  %v963 = vpack.c.b16 %v835, %v831
  %1092 = vmatprep.subr.bf16.mxu0 %v837
  %1093 = vmatpush1.bf16.msra.mxu0 %v836
  %1094 = vmatprep.subr.bf16.mxu0 %v841
  %1095 = vmatpush1.bf16.msra.mxu0 %v840
  %1096 = vmatprep.subr.bf16.mxu0 %v845
  %1097 = vmatpush1.bf16.msra.mxu0 %v844
  %1098 = vmatprep.subr.bf16.mxu0 %v849
  %1099 = vmatpush1.bf16.msra.mxu0 %v848
  %1100 = vmatprep.subr.bf16.mxu0 %v853
  %1101 = vmatpush1.bf16.msra.mxu0 %v852
  %1102 = vmatprep.subr.bf16.mxu0 %v857
  %1103 = vmatpush1.bf16.msra.mxu0 %v856
  %1104 = vmatprep.subr.bf16.mxu0 %v861
  %1105 = vmatpush1.bf16.msra.mxu0 %v860
  %1106 = vmatprep.subr.bf16.mxu0 %v865
  %1107 = vmatpush1.bf16.msra.mxu0 %v864
  %1108 = vmatprep.subr.bf16.mxu0 %v869
  %1109 = vmatpush1.bf16.msra.mxu0 %v868
  %1110 = vmatprep.subr.bf16.mxu0 %v873
  %1111 = vmatpush1.bf16.msra.mxu0 %v872
  %1112 = vmatprep.subr.bf16.mxu0 %v877
  %1113 = vmatpush1.bf16.msra.mxu0 %v876
  %1114 = vmatprep.subr.bf16.mxu0 %v881
  %1115 = vmatpush1.bf16.msra.mxu0 %v880
  %1116 = vmatprep.subr.bf16.mxu0 %v885
  %1117 = vmatpush1.bf16.msra.mxu0 %v884
  %1118 = vmatprep.subr.bf16.mxu0 %v889
  %1119 = vmatpush1.bf16.msra.mxu0 %v888
  %1120 = vmatprep.subr.bf16.mxu0 %v893
  %1121 = vmatpush1.bf16.msra.mxu0 %v892
  %1122 = vmatprep.subr.bf16.mxu0 %v897
  %1123 = vmatpush1.bf16.msra.mxu0 %v896
  %1124 = vmatprep.mubr.bf16.mxu0 %v295
  %1125 = vmatmul.mubr.bf16.gmra.mrb[0].mxu0 %v294
  %v1126 = vpop.f32.mrb[0].mxu0
  %v1127 = vadd.f32 %v435, %v1126
  %v1128 = vpop.f32.mrb[0].mxu0
  %v1129 = vadd.f32 %v439, %v1128
  %v1130 = vpop.f32.mrb[0].mxu0
  %v1131 = vadd.f32 %v435, %v1130
  %v1132 = vpop.f32.mrb[0].mxu0
  %v1133 = vadd.f32 %v439, %v1132
  %1134 = vmatprep.mubr.bf16.mxu0 %v299
  %1135 = vmatmul.mubr.bf16.gmra.mrb[0].mxu0 %v298
  %v1136 = vpop.f32.mrb[0].mxu0
  %v1137 = vadd.f32 %v435, %v1136
  %v1138 = vpop.f32.mrb[0].mxu0
  %v1139 = vadd.f32 %v439, %v1138
  %v1140 = vpop.f32.mrb[0].mxu0
  %v1141 = vadd.f32 %v435, %v1140
  %v1142 = vpop.f32.mrb[0].mxu0
  %v1143 = vadd.f32 %v439, %v1142
  %1144 = vdwg.mxu0
  %1145 = vmatprep.subr.bf16.mxu0 %v901
  %1146 = vmatpush1.bf16.msra.mxu0 %v900
  %1147 = vmatprep.subr.bf16.mxu0 %v905
  %1148 = vmatpush1.bf16.msra.mxu0 %v904
  %1149 = vmatprep.subr.bf16.mxu0 %v909
  %1150 = vmatpush1.bf16.msra.mxu0 %v908
  %1151 = vmatprep.subr.bf16.mxu0 %v913
  %1152 = vmatpush1.bf16.msra.mxu0 %v912
  %1153 = vmatprep.subr.bf16.mxu0 %v917
  %1154 = vmatpush1.bf16.msra.mxu0 %v916
  %1155 = vmatprep.subr.bf16.mxu0 %v921
  %1156 = vmatpush1.bf16.msra.mxu0 %v920
  %1157 = vmatprep.subr.bf16.mxu0 %v925
  %1158 = vmatpush1.bf16.msra.mxu0 %v924
  %1159 = vmatprep.subr.bf16.mxu0 %v929
  %1160 = vmatpush1.bf16.msra.mxu0 %v928
  %1161 = vmatprep.subr.bf16.mxu0 %v933
  %1162 = vmatpush1.bf16.msra.mxu0 %v932
  %1163 = vmatprep.subr.bf16.mxu0 %v937
  %1164 = vmatpush1.bf16.msra.mxu0 %v936
  %1165 = vmatprep.subr.bf16.mxu0 %v941
  %1166 = vmatpush1.bf16.msra.mxu0 %v940
  %1167 = vmatprep.subr.bf16.mxu0 %v945
  %1168 = vmatpush1.bf16.msra.mxu0 %v944
  %1169 = vmatprep.subr.bf16.mxu0 %v949
  %1170 = vmatpush1.bf16.msra.mxu0 %v948
  %1171 = vmatprep.subr.bf16.mxu0 %v953
  %1172 = vmatpush1.bf16.msra.mxu0 %v952
  %1173 = vmatprep.subr.bf16.mxu0 %v957
  %1174 = vmatpush1.bf16.msra.mxu0 %v956
  %1175 = vmatprep.subr.bf16.mxu0 %v961
  %1176 = vmatpush1.bf16.msra.mxu0 %v960
  %1177 = vmatprep.mubr.bf16.mxu0 %v297
  %1178 = vmatmul.mubr.bf16.gmra.mrb[0].mxu0 %v296
  %v1179 = vpop.f32.mrb[0].mxu0
  %v1180 = vadd.f32 %v1127, %v1179
  %v1181 = vpop.f32.mrb[0].mxu0
  %v1182 = vadd.f32 %v1129, %v1181
  %v1183 = vpop.f32.mrb[0].mxu0
  %v1184 = vadd.f32 %v1131, %v1183
  %v1185 = vpop.f32.mrb[0].mxu0
  %v1186 = vadd.f32 %v1133, %v1185
  %1187 = vmatprep.mubr.bf16.mxu0 %v301
  %1188 = vmatmul.mubr.bf16.gmra.mrb[0].mxu0 %v300
  %v1189 = vpop.f32.mrb[0].mxu0
  %v1190 = vadd.f32 %v1137, %v1189
  %v1191 = vpop.f32.mrb[0].mxu0
  %v1192 = vadd.f32 %v1139, %v1191
  %v1193 = vpop.f32.mrb[0].mxu0
  %v1194 = vadd.f32 %v1141, %v1193
  %v1195 = vpop.f32.mrb[0].mxu0
  %v1196 = vadd.f32 %v1143, %v1195
  %1197 = vdwg.mxu0
  %1198 = vmatprep.subr.bf16.mxu0 %v839
  %1199 = vmatpush1.bf16.msra.mxu0 %v838
  %1200 = vmatprep.subr.bf16.mxu0 %v843
  %1201 = vmatpush1.bf16.msra.mxu0 %v842
  %1202 = vmatprep.subr.bf16.mxu0 %v847
  %1203 = vmatpush1.bf16.msra.mxu0 %v846
  %1204 = vmatprep.subr.bf16.mxu0 %v851
  %1205 = vmatpush1.bf16.msra.mxu0 %v850
  %1206 = vmatprep.subr.bf16.mxu0 %v855
  %1207 = vmatpush1.bf16.msra.mxu0 %v854
  %1208 = vmatprep.subr.bf16.mxu0 %v859
  %1209 = vmatpush1.bf16.msra.mxu0 %v858
  %1210 = vmatprep.subr.bf16.mxu0 %v863
  %1211 = vmatpush1.bf16.msra.mxu0 %v862
  %1212 = vmatprep.subr.bf16.mxu0 %v867
  %1213 = vmatpush1.bf16.msra.mxu0 %v866
  %1214 = vmatprep.subr.bf16.mxu0 %v871
  %1215 = vmatpush1.bf16.msra.mxu0 %v870
  %1216 = vmatprep.subr.bf16.mxu0 %v875
  %1217 = vmatpush1.bf16.msra.mxu0 %v874
  %1218 = vmatprep.subr.bf16.mxu0 %v879
  %1219 = vmatpush1.bf16.msra.mxu0 %v878
  %1220 = vmatprep.subr.bf16.mxu0 %v883
  %1221 = vmatpush1.bf16.msra.mxu0 %v882
  %1222 = vmatprep.subr.bf16.mxu0 %v887
  %1223 = vmatpush1.bf16.msra.mxu0 %v886
  %1224 = vmatprep.subr.bf16.mxu0 %v891
  %1225 = vmatpush1.bf16.msra.mxu0 %v890
  %1226 = vmatprep.subr.bf16.mxu0 %v895
  %1227 = vmatpush1.bf16.msra.mxu0 %v894
  %1228 = vmatprep.subr.bf16.mxu0 %v899
  %1229 = vmatpush1.bf16.msra.mxu0 %v898
  %1230 = vmatprep.mubr.bf16.mxu0 %v295
  %1231 = vmatmul.mubr.bf16.gmra.mrb[0].mxu0 %v294
  %v1232 = vpop.f32.mrb[0].mxu0
  %v1233 = vadd.f32 %v443, %v1232
  %v1234 = vpop.f32.mrb[0].mxu0
  %v1235 = vadd.f32 %v447, %v1234
  %v1236 = vpop.f32.mrb[0].mxu0
  %v1237 = vadd.f32 %v443, %v1236
  %v1238 = vpop.f32.mrb[0].mxu0
  %v1239 = vadd.f32 %v447, %v1238
  %1240 = vmatprep.mubr.bf16.mxu0 %v299
  %1241 = vmatmul.mubr.bf16.gmra.mrb[0].mxu0 %v298
  %v1242 = vpop.f32.mrb[0].mxu0
  %v1243 = vadd.f32 %v443, %v1242
  %v1244 = vpop.f32.mrb[0].mxu0
  %v1245 = vadd.f32 %v447, %v1244
  %v1246 = vpop.f32.mrb[0].mxu0
  %v1247 = vadd.f32 %v443, %v1246
  %v1248 = vpop.f32.mrb[0].mxu0
  %v1249 = vadd.f32 %v447, %v1248
  %1250 = vdwg.mxu0
  %1251 = vmatprep.subr.bf16.mxu0 %v903
  %1252 = vmatpush1.bf16.msra.mxu0 %v902
  %1253 = vmatprep.subr.bf16.mxu0 %v907
  %1254 = vmatpush1.bf16.msra.mxu0 %v906
  %1255 = vmatprep.subr.bf16.mxu0 %v911
  %1256 = vmatpush1.bf16.msra.mxu0 %v910
  %1257 = vmatprep.subr.bf16.mxu0 %v915
  %1258 = vmatpush1.bf16.msra.mxu0 %v914
  %1259 = vmatprep.subr.bf16.mxu0 %v919
  %1260 = vmatpush1.bf16.msra.mxu0 %v918
  %1261 = vmatprep.subr.bf16.mxu0 %v923
  %1262 = vmatpush1.bf16.msra.mxu0 %v922
  %1263 = vmatprep.subr.bf16.mxu0 %v927
  %1264 = vmatpush1.bf16.msra.mxu0 %v926
  %1265 = vmatprep.subr.bf16.mxu0 %v931
  %1266 = vmatpush1.bf16.msra.mxu0 %v930
  %1267 = vmatprep.subr.bf16.mxu0 %v935
  %1268 = vmatpush1.bf16.msra.mxu0 %v934
  %1269 = vmatprep.subr.bf16.mxu0 %v939
  %1270 = vmatpush1.bf16.msra.mxu0 %v938
  %1271 = vmatprep.subr.bf16.mxu0 %v943
  %1272 = vmatpush1.bf16.msra.mxu0 %v942
  %1273 = vmatprep.subr.bf16.mxu0 %v947
  %1274 = vmatpush1.bf16.msra.mxu0 %v946
  %1275 = vmatprep.subr.bf16.mxu0 %v951
  %1276 = vmatpush1.bf16.msra.mxu0 %v950
  %1277 = vmatprep.subr.bf16.mxu0 %v955
  %1278 = vmatpush1.bf16.msra.mxu0 %v954
  %1279 = vmatprep.subr.bf16.mxu0 %v959
  %1280 = vmatpush1.bf16.msra.mxu0 %v958
  %1281 = vmatprep.subr.bf16.mxu0 %v963
  %1282 = vmatpush1.bf16.msra.mxu0 %v962
  %1283 = vmatprep.mubr.bf16.mxu0 %v297
  %1284 = vmatmul.mubr.bf16.gmra.mrb[0].mxu0 %v296
  %v1285 = vpop.f32.mrb[0].mxu0
  %v1286 = vadd.f32 %v1233, %v1285
  %v1287 = vpop.f32.mrb[0].mxu0
  %v1288 = vadd.f32 %v1235, %v1287
  %v1289 = vpop.f32.mrb[0].mxu0
  %v1290 = vadd.f32 %v1237, %v1289
  %v1291 = vpop.f32.mrb[0].mxu0
  %v1292 = vadd.f32 %v1239, %v1291
  %1293 = vmatprep.mubr.bf16.mxu0 %v301
  %1294 = vmatmul.mubr.bf16.gmra.mrb[0].mxu0 %v300
  %v1295 = vpop.f32.mrb[0].mxu0
  %v1296 = vadd.f32 %v1243, %v1295
  %v1297 = vpop.f32.mrb[0].mxu0
  %v1298 = vadd.f32 %v1245, %v1297
  %v1299 = vpop.f32.mrb[0].mxu0
  %v1300 = vadd.f32 %v1247, %v1299
  %v1301 = vpop.f32.mrb[0].mxu0
  %v1302 = vadd.f32 %v1249, %v1301
  %1303 = vdwg.mxu0
  %v1304 = vmul.f32 %v1180, 0.5
  %v1305 = vmul.f32 %v1182, 0.5
  %v1306 = vmul.f32 %v1286, 0.5
  %v1307 = vmul.f32 %v1288, 0.5
  %v1308 = vmul.f32 %v1184, 0.5
  %v1309 = vmul.f32 %v1186, 0.5
  %v1310 = vmul.f32 %v1290, 0.5
  %v1311 = vmul.f32 %v1292, 0.5
  %v1312 = vmul.f32 %v1190, 0.5
  %v1313 = vmul.f32 %v1192, 0.5
  %v1314 = vmul.f32 %v1296, 0.5
  %v1315 = vmul.f32 %v1298, 0.5
  %v1316 = vmul.f32 %v1194, 0.5
  %v1317 = vmul.f32 %v1196, 0.5
  %v1318 = vmul.f32 %v1300, 0.5
  %v1319 = vmul.f32 %v1302, 0.5
  %v1320 = vtanh.pop %v1304
  %v1321 = vtanh.pop %v1305
  %v1322 = vtanh.pop %v1306
  %v1323 = vtanh.pop %v1307
  %v1324 = vtanh.pop %v1308
  %v1325 = vtanh.pop %v1309
  %v1326 = vtanh.pop %v1310
  %v1327 = vtanh.pop %v1311
  %v1328 = vtanh.pop %v1312
  %v1329 = vtanh.pop %v1313
  %v1330 = vtanh.pop %v1314
  %v1331 = vtanh.pop %v1315
  %v1332 = vtanh.pop %v1316
  %v1333 = vtanh.pop %v1317
  %v1334 = vtanh.pop %v1318
  %v1335 = vtanh.pop %v1319
  %v1336 = vadd.f32 %v1320, 1.0
  %v1337 = vadd.f32 %v1321, 1.0
  %v1338 = vadd.f32 %v1322, 1.0
  %v1339 = vadd.f32 %v1323, 1.0
  %v1340 = vadd.f32 %v1324, 1.0
  %v1341 = vadd.f32 %v1325, 1.0
  %v1342 = vadd.f32 %v1326, 1.0
  %v1343 = vadd.f32 %v1327, 1.0
  %v1344 = vadd.f32 %v1328, 1.0
  %v1345 = vadd.f32 %v1329, 1.0
  %v1346 = vadd.f32 %v1330, 1.0
  %v1347 = vadd.f32 %v1331, 1.0
  %v1348 = vadd.f32 %v1332, 1.0
  %v1349 = vadd.f32 %v1333, 1.0
  %v1350 = vadd.f32 %v1334, 1.0
  %v1351 = vadd.f32 %v1335, 1.0
  %v1352 = vmul.f32 %v1304, %v1336
  %v1353 = vmul.f32 %v1305, %v1337
  %v1354 = vmul.f32 %v1306, %v1338
  %v1355 = vmul.f32 %v1307, %v1339
  %v1356 = vmul.f32 %v1308, %v1340
  %v1357 = vmul.f32 %v1309, %v1341
  %v1358 = vmul.f32 %v1310, %v1342
  %v1359 = vmul.f32 %v1311, %v1343
  %v1360 = vmul.f32 %v1312, %v1344
  %v1361 = vmul.f32 %v1313, %v1345
  %v1362 = vmul.f32 %v1314, %v1346
  %v1363 = vmul.f32 %v1315, %v1347
  %v1364 = vmul.f32 %v1316, %v1348
  %v1365 = vmul.f32 %v1317, %v1349
  %v1366 = vmul.f32 %v1318, %v1350
  %v1367 = vmul.f32 %v1319, %v1351
  %v1368 = vpack.c.bf16 %v1356, %v1352
  %v1369 = vpack.c.bf16 %v1357, %v1353
  %v1370 = vpack.c.bf16 %v1358, %v1354
  %v1371 = vpack.c.bf16 %v1359, %v1355
  %v1372 = vpack.c.bf16 %v1364, %v1360
  %v1373 = vpack.c.bf16 %v1365, %v1361
  %v1374 = vpack.c.bf16 %v1366, %v1362
  %v1375 = vpack.c.bf16 %v1367, %v1363
  %v1376 = vld [vmem:[%s5] sm:$0xff]
  %v1377 = vld [vmem:[%s5 + $0x8] sm:$0xff]
  %v1378 = vld [vmem:[%s5 + $0x10] sm:$0xff]
  %v1379 = vld [vmem:[%s5 + $0x18] sm:$0xff]
  %v1380 = vld [vmem:[%s5 + $0x20] sm:$0xff]
  %v1381 = vld [vmem:[%s5 + $0x28] sm:$0xff]
  %v1382 = vld [vmem:[%s5 + $0x30] sm:$0xff]
  %v1383 = vld [vmem:[%s5 + $0x38] sm:$0xff]
  %v1384 = vld [vmem:[%s5 + $0x40] sm:$0xff]
  %v1385 = vld [vmem:[%s5 + $0x48] sm:$0xff]
  %v1386 = vld [vmem:[%s5 + $0x50] sm:$0xff]
  %v1387 = vld [vmem:[%s5 + $0x58] sm:$0xff]
  %v1388 = vld [vmem:[%s5 + $0x60] sm:$0xff]
  %v1389 = vld [vmem:[%s5 + $0x68] sm:$0xff]
  %v1390 = vld [vmem:[%s5 + $0x70] sm:$0xff]
  %v1391 = vld [vmem:[%s5 + $0x78] sm:$0xff]
  %v1392 = vld [vmem:[%s5 + $0x80] sm:$0xff]
  %v1393 = vld [vmem:[%s5 + $0x88] sm:$0xff]
  %v1394 = vld [vmem:[%s5 + $0x90] sm:$0xff]
  %v1395 = vld [vmem:[%s5 + $0x98] sm:$0xff]
  %v1396 = vld [vmem:[%s5 + $0xa0] sm:$0xff]
  %v1397 = vld [vmem:[%s5 + $0xa8] sm:$0xff]
  %v1398 = vld [vmem:[%s5 + $0xb0] sm:$0xff]
  %v1399 = vld [vmem:[%s5 + $0xb8] sm:$0xff]
  %v1400 = vld [vmem:[%s5 + $0xc0] sm:$0xff]
  %v1401 = vld [vmem:[%s5 + $0xc8] sm:$0xff]
  %v1402 = vld [vmem:[%s5 + $0xd0] sm:$0xff]
  %v1403 = vld [vmem:[%s5 + $0xd8] sm:$0xff]
  %v1404 = vld [vmem:[%s5 + $0xe0] sm:$0xff]
  %v1405 = vld [vmem:[%s5 + $0xe8] sm:$0xff]
  %v1406 = vld [vmem:[%s5 + $0xf0] sm:$0xff]
  %v1407 = vld [vmem:[%s5 + $0xf8] sm:$0xff]
  %v1408 = vld [vmem:[%s5 + $0x100] sm:$0xff]
  %v1409 = vld [vmem:[%s5 + $0x108] sm:$0xff]
  %v1410 = vld [vmem:[%s5 + $0x110] sm:$0xff]
  %v1411 = vld [vmem:[%s5 + $0x118] sm:$0xff]
  %v1412 = vld [vmem:[%s5 + $0x120] sm:$0xff]
  %v1413 = vld [vmem:[%s5 + $0x128] sm:$0xff]
  %v1414 = vld [vmem:[%s5 + $0x130] sm:$0xff]
  %v1415 = vld [vmem:[%s5 + $0x138] sm:$0xff]
  %v1416 = vld [vmem:[%s5 + $0x140] sm:$0xff]
  %v1417 = vld [vmem:[%s5 + $0x148] sm:$0xff]
  %v1418 = vld [vmem:[%s5 + $0x150] sm:$0xff]
  %v1419 = vld [vmem:[%s5 + $0x158] sm:$0xff]
  %v1420 = vld [vmem:[%s5 + $0x160] sm:$0xff]
  %v1421 = vld [vmem:[%s5 + $0x168] sm:$0xff]
  %v1422 = vld [vmem:[%s5 + $0x170] sm:$0xff]
  %v1423 = vld [vmem:[%s5 + $0x178] sm:$0xff]
  %v1424 = vld [vmem:[%s5 + $0x180] sm:$0xff]
  %v1425 = vld [vmem:[%s5 + $0x188] sm:$0xff]
  %v1426 = vld [vmem:[%s5 + $0x190] sm:$0xff]
  %v1427 = vld [vmem:[%s5 + $0x198] sm:$0xff]
  %v1428 = vld [vmem:[%s5 + $0x1a0] sm:$0xff]
  %v1429 = vld [vmem:[%s5 + $0x1a8] sm:$0xff]
  %v1430 = vld [vmem:[%s5 + $0x1b0] sm:$0xff]
  %v1431 = vld [vmem:[%s5 + $0x1b8] sm:$0xff]
  %v1432 = vld [vmem:[%s5 + $0x1c0] sm:$0xff]
  %v1433 = vld [vmem:[%s5 + $0x1c8] sm:$0xff]
  %v1434 = vld [vmem:[%s5 + $0x1d0] sm:$0xff]
  %v1435 = vld [vmem:[%s5 + $0x1d8] sm:$0xff]
  %v1436 = vld [vmem:[%s5 + $0x1e0] sm:$0xff]
  %v1437 = vld [vmem:[%s5 + $0x1e8] sm:$0xff]
  %v1438 = vld [vmem:[%s5 + $0x1f0] sm:$0xff]
  %v1439 = vld [vmem:[%s5 + $0x1f8] sm:$0xff]
  %v1440 = vld [vmem:[%s5 + $0x200] sm:$0xff]
  %v1441 = vld [vmem:[%s5 + $0x208] sm:$0xff]
  %v1442 = vld [vmem:[%s5 + $0x210] sm:$0xff]
  %v1443 = vld [vmem:[%s5 + $0x218] sm:$0xff]
  %v1444 = vld [vmem:[%s5 + $0x220] sm:$0xff]
  %v1445 = vld [vmem:[%s5 + $0x228] sm:$0xff]
  %v1446 = vld [vmem:[%s5 + $0x230] sm:$0xff]
  %v1447 = vld [vmem:[%s5 + $0x238] sm:$0xff]
  %v1448 = vld [vmem:[%s5 + $0x240] sm:$0xff]
  %v1449 = vld [vmem:[%s5 + $0x248] sm:$0xff]
  %v1450 = vld [vmem:[%s5 + $0x250] sm:$0xff]
  %v1451 = vld [vmem:[%s5 + $0x258] sm:$0xff]
  %v1452 = vld [vmem:[%s5 + $0x260] sm:$0xff]
  %v1453 = vld [vmem:[%s5 + $0x268] sm:$0xff]
  %v1454 = vld [vmem:[%s5 + $0x270] sm:$0xff]
  %v1455 = vld [vmem:[%s5 + $0x278] sm:$0xff]
  %v1456 = vld [vmem:[%s5 + $0x280] sm:$0xff]
  %v1457 = vld [vmem:[%s5 + $0x288] sm:$0xff]
  %v1458 = vld [vmem:[%s5 + $0x290] sm:$0xff]
  %v1459 = vld [vmem:[%s5 + $0x298] sm:$0xff]
  %v1460 = vld [vmem:[%s5 + $0x2a0] sm:$0xff]
  %v1461 = vld [vmem:[%s5 + $0x2a8] sm:$0xff]
  %v1462 = vld [vmem:[%s5 + $0x2b0] sm:$0xff]
  %v1463 = vld [vmem:[%s5 + $0x2b8] sm:$0xff]
  %v1464 = vld [vmem:[%s5 + $0x2c0] sm:$0xff]
  %v1465 = vld [vmem:[%s5 + $0x2c8] sm:$0xff]
  %v1466 = vld [vmem:[%s5 + $0x2d0] sm:$0xff]
  %v1467 = vld [vmem:[%s5 + $0x2d8] sm:$0xff]
  %v1468 = vld [vmem:[%s5 + $0x2e0] sm:$0xff]
  %v1469 = vld [vmem:[%s5 + $0x2e8] sm:$0xff]
  %v1470 = vld [vmem:[%s5 + $0x2f0] sm:$0xff]
  %v1471 = vld [vmem:[%s5 + $0x2f8] sm:$0xff]
  %v1472 = vld [vmem:[%s5 + $0x300] sm:$0xff]
  %v1473 = vld [vmem:[%s5 + $0x308] sm:$0xff]
  %v1474 = vld [vmem:[%s5 + $0x310] sm:$0xff]
  %v1475 = vld [vmem:[%s5 + $0x318] sm:$0xff]
  %v1476 = vld [vmem:[%s5 + $0x320] sm:$0xff]
  %v1477 = vld [vmem:[%s5 + $0x328] sm:$0xff]
  %v1478 = vld [vmem:[%s5 + $0x330] sm:$0xff]
  %v1479 = vld [vmem:[%s5 + $0x338] sm:$0xff]
  %v1480 = vld [vmem:[%s5 + $0x340] sm:$0xff]
  %v1481 = vld [vmem:[%s5 + $0x348] sm:$0xff]
  %v1482 = vld [vmem:[%s5 + $0x350] sm:$0xff]
  %v1483 = vld [vmem:[%s5 + $0x358] sm:$0xff]
  %v1484 = vld [vmem:[%s5 + $0x360] sm:$0xff]
  %v1485 = vld [vmem:[%s5 + $0x368] sm:$0xff]
  %v1486 = vld [vmem:[%s5 + $0x370] sm:$0xff]
  %v1487 = vld [vmem:[%s5 + $0x378] sm:$0xff]
  %v1488 = vld [vmem:[%s5 + $0x380] sm:$0xff]
  %v1489 = vld [vmem:[%s5 + $0x388] sm:$0xff]
  %v1490 = vld [vmem:[%s5 + $0x390] sm:$0xff]
  %v1491 = vld [vmem:[%s5 + $0x398] sm:$0xff]
  %v1492 = vld [vmem:[%s5 + $0x3a0] sm:$0xff]
  %v1493 = vld [vmem:[%s5 + $0x3a8] sm:$0xff]
  %v1494 = vld [vmem:[%s5 + $0x3b0] sm:$0xff]
  %v1495 = vld [vmem:[%s5 + $0x3b8] sm:$0xff]
  %v1496 = vld [vmem:[%s5 + $0x3c0] sm:$0xff]
  %v1497 = vld [vmem:[%s5 + $0x3c8] sm:$0xff]
  %v1498 = vld [vmem:[%s5 + $0x3d0] sm:$0xff]
  %v1499 = vld [vmem:[%s5 + $0x3d8] sm:$0xff]
  %v1500 = vld [vmem:[%s5 + $0x3e0] sm:$0xff]
  %v1501 = vld [vmem:[%s5 + $0x3e8] sm:$0xff]
  %v1502 = vld [vmem:[%s5 + $0x3f0] sm:$0xff]
  %v1503 = vld [vmem:[%s5 + $0x3f8] sm:$0xff]
  %v1504 = vld [vmem:[%s6] sm:$0xf]
  %v1506 = vlaneseq
  %v1507 = vshrl.u32 %v1506, 7
  %v1508 = vsub.s32 0, %v1507
  %v1509 = vrot.slane %v1504, %v1508
  %v1510 = vlaneseq
  %v1511 = vshrl.u32 %v1510, 7
  %v1512 = vsub.s32 1, %v1511
  %v1513 = vrot.slane %v1504, %v1512
  %v1514 = vlaneseq
  %v1515 = vshrl.u32 %v1514, 7
  %v1516 = vsub.s32 2, %v1515
  %v1517 = vrot.slane %v1504, %v1516
  %v1518 = vlaneseq
  %v1519 = vshrl.u32 %v1518, 7
  %v1520 = vsub.s32 3, %v1519
  %v1521 = vrot.slane %v1504, %v1520
  %v1654 = vunpack.c.l.b16 %v1376
  %v1655 = vunpack.c.h.b16 %v1376
  %v1656 = vunpack.c.l.b16 %v1377
  %v1657 = vunpack.c.h.b16 %v1377
  %v1658 = vunpack.c.l.b16 %v1378
  %v1659 = vunpack.c.h.b16 %v1378
  %v1660 = vunpack.c.l.b16 %v1379
  %v1661 = vunpack.c.h.b16 %v1379
  %v1662 = vunpack.c.l.b16 %v1380
  %v1663 = vunpack.c.h.b16 %v1380
  %v1664 = vunpack.c.l.b16 %v1381
  %v1665 = vunpack.c.h.b16 %v1381
  %v1666 = vunpack.c.l.b16 %v1382
  %v1667 = vunpack.c.h.b16 %v1382
  %v1668 = vunpack.c.l.b16 %v1383
  %v1669 = vunpack.c.h.b16 %v1383
  %v1670 = vunpack.c.l.b16 %v1384
  %v1671 = vunpack.c.h.b16 %v1384
  %v1672 = vunpack.c.l.b16 %v1385
  %v1673 = vunpack.c.h.b16 %v1385
  %v1674 = vunpack.c.l.b16 %v1386
  %v1675 = vunpack.c.h.b16 %v1386
  %v1676 = vunpack.c.l.b16 %v1387
  %v1677 = vunpack.c.h.b16 %v1387
  %v1678 = vunpack.c.l.b16 %v1388
  %v1679 = vunpack.c.h.b16 %v1388
  %v1680 = vunpack.c.l.b16 %v1389
  %v1681 = vunpack.c.h.b16 %v1389
  %v1682 = vunpack.c.l.b16 %v1390
  %v1683 = vunpack.c.h.b16 %v1390
  %v1684 = vunpack.c.l.b16 %v1391
  %v1685 = vunpack.c.h.b16 %v1391
  %v1686 = vunpack.c.l.b16 %v1392
  %v1687 = vunpack.c.h.b16 %v1392
  %v1688 = vunpack.c.l.b16 %v1393
  %v1689 = vunpack.c.h.b16 %v1393
  %v1690 = vunpack.c.l.b16 %v1394
  %v1691 = vunpack.c.h.b16 %v1394
  %v1692 = vunpack.c.l.b16 %v1395
  %v1693 = vunpack.c.h.b16 %v1395
  %v1694 = vunpack.c.l.b16 %v1396
  %v1695 = vunpack.c.h.b16 %v1396
  %v1696 = vunpack.c.l.b16 %v1397
  %v1697 = vunpack.c.h.b16 %v1397
  %v1698 = vunpack.c.l.b16 %v1398
  %v1699 = vunpack.c.h.b16 %v1398
  %v1700 = vunpack.c.l.b16 %v1399
  %v1701 = vunpack.c.h.b16 %v1399
  %v1702 = vunpack.c.l.b16 %v1400
  %v1703 = vunpack.c.h.b16 %v1400
  %v1704 = vunpack.c.l.b16 %v1401
  %v1705 = vunpack.c.h.b16 %v1401
  %v1706 = vunpack.c.l.b16 %v1402
  %v1707 = vunpack.c.h.b16 %v1402
  %v1708 = vunpack.c.l.b16 %v1403
  %v1709 = vunpack.c.h.b16 %v1403
  %v1710 = vunpack.c.l.b16 %v1404
  %v1711 = vunpack.c.h.b16 %v1404
  %v1712 = vunpack.c.l.b16 %v1405
  %v1713 = vunpack.c.h.b16 %v1405
  %v1714 = vunpack.c.l.b16 %v1406
  %v1715 = vunpack.c.h.b16 %v1406
  %v1716 = vunpack.c.l.b16 %v1407
  %v1717 = vunpack.c.h.b16 %v1407
  %v1718 = vunpack.c.l.b16 %v1408
  %v1719 = vunpack.c.h.b16 %v1408
  %v1720 = vunpack.c.l.b16 %v1409
  %v1721 = vunpack.c.h.b16 %v1409
  %v1722 = vunpack.c.l.b16 %v1410
  %v1723 = vunpack.c.h.b16 %v1410
  %v1724 = vunpack.c.l.b16 %v1411
  %v1725 = vunpack.c.h.b16 %v1411
  %v1726 = vunpack.c.l.b16 %v1412
  %v1727 = vunpack.c.h.b16 %v1412
  %v1728 = vunpack.c.l.b16 %v1413
  %v1729 = vunpack.c.h.b16 %v1413
  %v1730 = vunpack.c.l.b16 %v1414
  %v1731 = vunpack.c.h.b16 %v1414
  %v1732 = vunpack.c.l.b16 %v1415
  %v1733 = vunpack.c.h.b16 %v1415
  %v1734 = vunpack.c.l.b16 %v1416
  %v1735 = vunpack.c.h.b16 %v1416
  %v1736 = vunpack.c.l.b16 %v1417
  %v1737 = vunpack.c.h.b16 %v1417
  %v1738 = vunpack.c.l.b16 %v1418
  %v1739 = vunpack.c.h.b16 %v1418
  %v1740 = vunpack.c.l.b16 %v1419
  %v1741 = vunpack.c.h.b16 %v1419
  %v1742 = vunpack.c.l.b16 %v1420
  %v1743 = vunpack.c.h.b16 %v1420
  %v1744 = vunpack.c.l.b16 %v1421
  %v1745 = vunpack.c.h.b16 %v1421
  %v1746 = vunpack.c.l.b16 %v1422
  %v1747 = vunpack.c.h.b16 %v1422
  %v1748 = vunpack.c.l.b16 %v1423
  %v1749 = vunpack.c.h.b16 %v1423
  %v1750 = vunpack.c.l.b16 %v1424
  %v1751 = vunpack.c.h.b16 %v1424
  %v1752 = vunpack.c.l.b16 %v1425
  %v1753 = vunpack.c.h.b16 %v1425
  %v1754 = vunpack.c.l.b16 %v1426
  %v1755 = vunpack.c.h.b16 %v1426
  %v1756 = vunpack.c.l.b16 %v1427
  %v1757 = vunpack.c.h.b16 %v1427
  %v1758 = vunpack.c.l.b16 %v1428
  %v1759 = vunpack.c.h.b16 %v1428
  %v1760 = vunpack.c.l.b16 %v1429
  %v1761 = vunpack.c.h.b16 %v1429
  %v1762 = vunpack.c.l.b16 %v1430
  %v1763 = vunpack.c.h.b16 %v1430
  %v1764 = vunpack.c.l.b16 %v1431
  %v1765 = vunpack.c.h.b16 %v1431
  %v1766 = vunpack.c.l.b16 %v1432
  %v1767 = vunpack.c.h.b16 %v1432
  %v1768 = vunpack.c.l.b16 %v1433
  %v1769 = vunpack.c.h.b16 %v1433
  %v1770 = vunpack.c.l.b16 %v1434
  %v1771 = vunpack.c.h.b16 %v1434
  %v1772 = vunpack.c.l.b16 %v1435
  %v1773 = vunpack.c.h.b16 %v1435
  %v1774 = vunpack.c.l.b16 %v1436
  %v1775 = vunpack.c.h.b16 %v1436
  %v1776 = vunpack.c.l.b16 %v1437
  %v1777 = vunpack.c.h.b16 %v1437
  %v1778 = vunpack.c.l.b16 %v1438
  %v1779 = vunpack.c.h.b16 %v1438
  %v1780 = vunpack.c.l.b16 %v1439
  %v1781 = vunpack.c.h.b16 %v1439
  %v1782 = vunpack.c.l.b16 %v1440
  %v1783 = vunpack.c.h.b16 %v1440
  %v1784 = vunpack.c.l.b16 %v1441
  %v1785 = vunpack.c.h.b16 %v1441
  %v1786 = vunpack.c.l.b16 %v1442
  %v1787 = vunpack.c.h.b16 %v1442
  %v1788 = vunpack.c.l.b16 %v1443
  %v1789 = vunpack.c.h.b16 %v1443
  %v1790 = vunpack.c.l.b16 %v1444
  %v1791 = vunpack.c.h.b16 %v1444
  %v1792 = vunpack.c.l.b16 %v1445
  %v1793 = vunpack.c.h.b16 %v1445
  %v1794 = vunpack.c.l.b16 %v1446
  %v1795 = vunpack.c.h.b16 %v1446
  %v1796 = vunpack.c.l.b16 %v1447
  %v1797 = vunpack.c.h.b16 %v1447
  %v1798 = vunpack.c.l.b16 %v1448
  %v1799 = vunpack.c.h.b16 %v1448
  %v1800 = vunpack.c.l.b16 %v1449
  %v1801 = vunpack.c.h.b16 %v1449
  %v1802 = vunpack.c.l.b16 %v1450
  %v1803 = vunpack.c.h.b16 %v1450
  %v1804 = vunpack.c.l.b16 %v1451
  %v1805 = vunpack.c.h.b16 %v1451
  %v1806 = vunpack.c.l.b16 %v1452
  %v1807 = vunpack.c.h.b16 %v1452
  %v1808 = vunpack.c.l.b16 %v1453
  %v1809 = vunpack.c.h.b16 %v1453
  %v1810 = vunpack.c.l.b16 %v1454
  %v1811 = vunpack.c.h.b16 %v1454
  %v1812 = vunpack.c.l.b16 %v1455
  %v1813 = vunpack.c.h.b16 %v1455
  %v1814 = vunpack.c.l.b16 %v1456
  %v1815 = vunpack.c.h.b16 %v1456
  %v1816 = vunpack.c.l.b16 %v1457
  %v1817 = vunpack.c.h.b16 %v1457
  %v1818 = vunpack.c.l.b16 %v1458
  %v1819 = vunpack.c.h.b16 %v1458
  %v1820 = vunpack.c.l.b16 %v1459
  %v1821 = vunpack.c.h.b16 %v1459
  %v1822 = vunpack.c.l.b16 %v1460
  %v1823 = vunpack.c.h.b16 %v1460
  %v1824 = vunpack.c.l.b16 %v1461
  %v1825 = vunpack.c.h.b16 %v1461
  %v1826 = vunpack.c.l.b16 %v1462
  %v1827 = vunpack.c.h.b16 %v1462
  %v1828 = vunpack.c.l.b16 %v1463
  %v1829 = vunpack.c.h.b16 %v1463
  %v1830 = vunpack.c.l.b16 %v1464
  %v1831 = vunpack.c.h.b16 %v1464
  %v1832 = vunpack.c.l.b16 %v1465
  %v1833 = vunpack.c.h.b16 %v1465
  %v1834 = vunpack.c.l.b16 %v1466
  %v1835 = vunpack.c.h.b16 %v1466
  %v1836 = vunpack.c.l.b16 %v1467
  %v1837 = vunpack.c.h.b16 %v1467
  %v1838 = vunpack.c.l.b16 %v1468
  %v1839 = vunpack.c.h.b16 %v1468
  %v1840 = vunpack.c.l.b16 %v1469
  %v1841 = vunpack.c.h.b16 %v1469
  %v1842 = vunpack.c.l.b16 %v1470
  %v1843 = vunpack.c.h.b16 %v1470
  %v1844 = vunpack.c.l.b16 %v1471
  %v1845 = vunpack.c.h.b16 %v1471
  %v1846 = vunpack.c.l.b16 %v1472
  %v1847 = vunpack.c.h.b16 %v1472
  %v1848 = vunpack.c.l.b16 %v1473
  %v1849 = vunpack.c.h.b16 %v1473
  %v1850 = vunpack.c.l.b16 %v1474
  %v1851 = vunpack.c.h.b16 %v1474
  %v1852 = vunpack.c.l.b16 %v1475
  %v1853 = vunpack.c.h.b16 %v1475
  %v1854 = vunpack.c.l.b16 %v1476
  %v1855 = vunpack.c.h.b16 %v1476
  %v1856 = vunpack.c.l.b16 %v1477
  %v1857 = vunpack.c.h.b16 %v1477
  %v1858 = vunpack.c.l.b16 %v1478
  %v1859 = vunpack.c.h.b16 %v1478
  %v1860 = vunpack.c.l.b16 %v1479
  %v1861 = vunpack.c.h.b16 %v1479
  %v1862 = vunpack.c.l.b16 %v1480
  %v1863 = vunpack.c.h.b16 %v1480
  %v1864 = vunpack.c.l.b16 %v1481
  %v1865 = vunpack.c.h.b16 %v1481
  %v1866 = vunpack.c.l.b16 %v1482
  %v1867 = vunpack.c.h.b16 %v1482
  %v1868 = vunpack.c.l.b16 %v1483
  %v1869 = vunpack.c.h.b16 %v1483
  %v1870 = vunpack.c.l.b16 %v1484
  %v1871 = vunpack.c.h.b16 %v1484
  %v1872 = vunpack.c.l.b16 %v1485
  %v1873 = vunpack.c.h.b16 %v1485
  %v1874 = vunpack.c.l.b16 %v1486
  %v1875 = vunpack.c.h.b16 %v1486
  %v1876 = vunpack.c.l.b16 %v1487
  %v1877 = vunpack.c.h.b16 %v1487
  %v1878 = vunpack.c.l.b16 %v1488
  %v1879 = vunpack.c.h.b16 %v1488
  %v1880 = vunpack.c.l.b16 %v1489
  %v1881 = vunpack.c.h.b16 %v1489
  %v1882 = vunpack.c.l.b16 %v1490
  %v1883 = vunpack.c.h.b16 %v1490
  %v1884 = vunpack.c.l.b16 %v1491
  %v1885 = vunpack.c.h.b16 %v1491
  %v1886 = vunpack.c.l.b16 %v1492
  %v1887 = vunpack.c.h.b16 %v1492
  %v1888 = vunpack.c.l.b16 %v1493
  %v1889 = vunpack.c.h.b16 %v1493
  %v1890 = vunpack.c.l.b16 %v1494
  %v1891 = vunpack.c.h.b16 %v1494
  %v1892 = vunpack.c.l.b16 %v1495
  %v1893 = vunpack.c.h.b16 %v1495
  %v1894 = vunpack.c.l.b16 %v1496
  %v1895 = vunpack.c.h.b16 %v1496
  %v1896 = vunpack.c.l.b16 %v1497
  %v1897 = vunpack.c.h.b16 %v1497
  %v1898 = vunpack.c.l.b16 %v1498
  %v1899 = vunpack.c.h.b16 %v1498
  %v1900 = vunpack.c.l.b16 %v1499
  %v1901 = vunpack.c.h.b16 %v1499
  %v1902 = vunpack.c.l.b16 %v1500
  %v1903 = vunpack.c.h.b16 %v1500
  %v1904 = vunpack.c.l.b16 %v1501
  %v1905 = vunpack.c.h.b16 %v1501
  %v1906 = vunpack.c.l.b16 %v1502
  %v1907 = vunpack.c.h.b16 %v1502
  %v1908 = vunpack.c.l.b16 %v1503
  %v1909 = vunpack.c.h.b16 %v1503
  %v1910 = vpack.c.b16 %v1658, %v1654
  %v1911 = vpack.c.b16 %v1659, %v1655
  %v1912 = vpack.c.b16 %v1660, %v1656
  %v1913 = vpack.c.b16 %v1661, %v1657
  %v1914 = vpack.c.b16 %v1666, %v1662
  %v1915 = vpack.c.b16 %v1667, %v1663
  %v1916 = vpack.c.b16 %v1668, %v1664
  %v1917 = vpack.c.b16 %v1669, %v1665
  %v1918 = vpack.c.b16 %v1674, %v1670
  %v1919 = vpack.c.b16 %v1675, %v1671
  %v1920 = vpack.c.b16 %v1676, %v1672
  %v1921 = vpack.c.b16 %v1677, %v1673
  %v1922 = vpack.c.b16 %v1682, %v1678
  %v1923 = vpack.c.b16 %v1683, %v1679
  %v1924 = vpack.c.b16 %v1684, %v1680
  %v1925 = vpack.c.b16 %v1685, %v1681
  %v1926 = vpack.c.b16 %v1690, %v1686
  %v1927 = vpack.c.b16 %v1691, %v1687
  %v1928 = vpack.c.b16 %v1692, %v1688
  %v1929 = vpack.c.b16 %v1693, %v1689
  %v1930 = vpack.c.b16 %v1698, %v1694
  %v1931 = vpack.c.b16 %v1699, %v1695
  %v1932 = vpack.c.b16 %v1700, %v1696
  %v1933 = vpack.c.b16 %v1701, %v1697
  %v1934 = vpack.c.b16 %v1706, %v1702
  %v1935 = vpack.c.b16 %v1707, %v1703
  %v1936 = vpack.c.b16 %v1708, %v1704
  %v1937 = vpack.c.b16 %v1709, %v1705
  %v1938 = vpack.c.b16 %v1714, %v1710
  %v1939 = vpack.c.b16 %v1715, %v1711
  %v1940 = vpack.c.b16 %v1716, %v1712
  %v1941 = vpack.c.b16 %v1717, %v1713
  %v1942 = vpack.c.b16 %v1722, %v1718
  %v1943 = vpack.c.b16 %v1723, %v1719
  %v1944 = vpack.c.b16 %v1724, %v1720
  %v1945 = vpack.c.b16 %v1725, %v1721
  %v1946 = vpack.c.b16 %v1730, %v1726
  %v1947 = vpack.c.b16 %v1731, %v1727
  %v1948 = vpack.c.b16 %v1732, %v1728
  %v1949 = vpack.c.b16 %v1733, %v1729
  %v1950 = vpack.c.b16 %v1738, %v1734
  %v1951 = vpack.c.b16 %v1739, %v1735
  %v1952 = vpack.c.b16 %v1740, %v1736
  %v1953 = vpack.c.b16 %v1741, %v1737
  %v1954 = vpack.c.b16 %v1746, %v1742
  %v1955 = vpack.c.b16 %v1747, %v1743
  %v1956 = vpack.c.b16 %v1748, %v1744
  %v1957 = vpack.c.b16 %v1749, %v1745
  %v1958 = vpack.c.b16 %v1754, %v1750
  %v1959 = vpack.c.b16 %v1755, %v1751
  %v1960 = vpack.c.b16 %v1756, %v1752
  %v1961 = vpack.c.b16 %v1757, %v1753
  %v1962 = vpack.c.b16 %v1762, %v1758
  %v1963 = vpack.c.b16 %v1763, %v1759
  %v1964 = vpack.c.b16 %v1764, %v1760
  %v1965 = vpack.c.b16 %v1765, %v1761
  %v1966 = vpack.c.b16 %v1770, %v1766
  %v1967 = vpack.c.b16 %v1771, %v1767
  %v1968 = vpack.c.b16 %v1772, %v1768
  %v1969 = vpack.c.b16 %v1773, %v1769
  %v1970 = vpack.c.b16 %v1778, %v1774
  %v1971 = vpack.c.b16 %v1779, %v1775
  %v1972 = vpack.c.b16 %v1780, %v1776
  %v1973 = vpack.c.b16 %v1781, %v1777
  %v1974 = vpack.c.b16 %v1786, %v1782
  %v1975 = vpack.c.b16 %v1787, %v1783
  %v1976 = vpack.c.b16 %v1788, %v1784
  %v1977 = vpack.c.b16 %v1789, %v1785
  %v1978 = vpack.c.b16 %v1794, %v1790
  %v1979 = vpack.c.b16 %v1795, %v1791
  %v1980 = vpack.c.b16 %v1796, %v1792
  %v1981 = vpack.c.b16 %v1797, %v1793
  %v1982 = vpack.c.b16 %v1802, %v1798
  %v1983 = vpack.c.b16 %v1803, %v1799
  %v1984 = vpack.c.b16 %v1804, %v1800
  %v1985 = vpack.c.b16 %v1805, %v1801
  %v1986 = vpack.c.b16 %v1810, %v1806
  %v1987 = vpack.c.b16 %v1811, %v1807
  %v1988 = vpack.c.b16 %v1812, %v1808
  %v1989 = vpack.c.b16 %v1813, %v1809
  %v1990 = vpack.c.b16 %v1818, %v1814
  %v1991 = vpack.c.b16 %v1819, %v1815
  %v1992 = vpack.c.b16 %v1820, %v1816
  %v1993 = vpack.c.b16 %v1821, %v1817
  %v1994 = vpack.c.b16 %v1826, %v1822
  %v1995 = vpack.c.b16 %v1827, %v1823
  %v1996 = vpack.c.b16 %v1828, %v1824
  %v1997 = vpack.c.b16 %v1829, %v1825
  %v1998 = vpack.c.b16 %v1834, %v1830
  %v1999 = vpack.c.b16 %v1835, %v1831
  %v2000 = vpack.c.b16 %v1836, %v1832
  %v2001 = vpack.c.b16 %v1837, %v1833
  %v2002 = vpack.c.b16 %v1842, %v1838
  %v2003 = vpack.c.b16 %v1843, %v1839
  %v2004 = vpack.c.b16 %v1844, %v1840
  %v2005 = vpack.c.b16 %v1845, %v1841
  %v2006 = vpack.c.b16 %v1850, %v1846
  %v2007 = vpack.c.b16 %v1851, %v1847
  %v2008 = vpack.c.b16 %v1852, %v1848
  %v2009 = vpack.c.b16 %v1853, %v1849
  %v2010 = vpack.c.b16 %v1858, %v1854
  %v2011 = vpack.c.b16 %v1859, %v1855
  %v2012 = vpack.c.b16 %v1860, %v1856
  %v2013 = vpack.c.b16 %v1861, %v1857
  %v2014 = vpack.c.b16 %v1866, %v1862
  %v2015 = vpack.c.b16 %v1867, %v1863
  %v2016 = vpack.c.b16 %v1868, %v1864
  %v2017 = vpack.c.b16 %v1869, %v1865
  %v2018 = vpack.c.b16 %v1874, %v1870
  %v2019 = vpack.c.b16 %v1875, %v1871
  %v2020 = vpack.c.b16 %v1876, %v1872
  %v2021 = vpack.c.b16 %v1877, %v1873
  %v2022 = vpack.c.b16 %v1882, %v1878
  %v2023 = vpack.c.b16 %v1883, %v1879
  %v2024 = vpack.c.b16 %v1884, %v1880
  %v2025 = vpack.c.b16 %v1885, %v1881
  %v2026 = vpack.c.b16 %v1890, %v1886
  %v2027 = vpack.c.b16 %v1891, %v1887
  %v2028 = vpack.c.b16 %v1892, %v1888
  %v2029 = vpack.c.b16 %v1893, %v1889
  %v2030 = vpack.c.b16 %v1898, %v1894
  %v2031 = vpack.c.b16 %v1899, %v1895
  %v2032 = vpack.c.b16 %v1900, %v1896
  %v2033 = vpack.c.b16 %v1901, %v1897
  %v2034 = vpack.c.b16 %v1906, %v1902
  %v2035 = vpack.c.b16 %v1907, %v1903
  %v2036 = vpack.c.b16 %v1908, %v1904
  %v2037 = vpack.c.b16 %v1909, %v1905
  %2166 = vmatprep.subr.bf16.mxu0 %v1911
  %2167 = vmatpush1.bf16.msra.mxu0 %v1910
  %2168 = vmatprep.subr.bf16.mxu0 %v1915
  %2169 = vmatpush1.bf16.msra.mxu0 %v1914
  %2170 = vmatprep.subr.bf16.mxu0 %v1919
  %2171 = vmatpush1.bf16.msra.mxu0 %v1918
  %2172 = vmatprep.subr.bf16.mxu0 %v1923
  %2173 = vmatpush1.bf16.msra.mxu0 %v1922
  %2174 = vmatprep.subr.bf16.mxu0 %v1927
  %2175 = vmatpush1.bf16.msra.mxu0 %v1926
  %2176 = vmatprep.subr.bf16.mxu0 %v1931
  %2177 = vmatpush1.bf16.msra.mxu0 %v1930
  %2178 = vmatprep.subr.bf16.mxu0 %v1935
  %2179 = vmatpush1.bf16.msra.mxu0 %v1934
  %2180 = vmatprep.subr.bf16.mxu0 %v1939
  %2181 = vmatpush1.bf16.msra.mxu0 %v1938
  %2182 = vmatprep.subr.bf16.mxu0 %v1943
  %2183 = vmatpush1.bf16.msra.mxu0 %v1942
  %2184 = vmatprep.subr.bf16.mxu0 %v1947
  %2185 = vmatpush1.bf16.msra.mxu0 %v1946
  %2186 = vmatprep.subr.bf16.mxu0 %v1951
  %2187 = vmatpush1.bf16.msra.mxu0 %v1950
  %2188 = vmatprep.subr.bf16.mxu0 %v1955
  %2189 = vmatpush1.bf16.msra.mxu0 %v1954
  %2190 = vmatprep.subr.bf16.mxu0 %v1959
  %2191 = vmatpush1.bf16.msra.mxu0 %v1958
  %2192 = vmatprep.subr.bf16.mxu0 %v1963
  %2193 = vmatpush1.bf16.msra.mxu0 %v1962
  %2194 = vmatprep.subr.bf16.mxu0 %v1967
  %2195 = vmatpush1.bf16.msra.mxu0 %v1966
  %2196 = vmatprep.subr.bf16.mxu0 %v1971
  %2197 = vmatpush1.bf16.msra.mxu0 %v1970
  %2198 = vmatprep.mubr.bf16.mxu0 %v1369
  %2199 = vmatmul.mubr.bf16.gmra.mrb[0].mxu0 %v1368
  %v2200 = vpop.f32.mrb[0].mxu0
  %v2201 = vadd.f32 %v1509, %v2200
  %v2202 = vpop.f32.mrb[0].mxu0
  %v2203 = vadd.f32 %v1513, %v2202
  %v2204 = vpop.f32.mrb[0].mxu0
  %v2205 = vadd.f32 %v1509, %v2204
  %v2206 = vpop.f32.mrb[0].mxu0
  %v2207 = vadd.f32 %v1513, %v2206
  %2208 = vmatprep.mubr.bf16.mxu0 %v1373
  %2209 = vmatmul.mubr.bf16.gmra.mrb[0].mxu0 %v1372
  %v2210 = vpop.f32.mrb[0].mxu0
  %v2211 = vadd.f32 %v1509, %v2210
  %v2212 = vpop.f32.mrb[0].mxu0
  %v2213 = vadd.f32 %v1513, %v2212
  %v2214 = vpop.f32.mrb[0].mxu0
  %v2215 = vadd.f32 %v1509, %v2214
  %v2216 = vpop.f32.mrb[0].mxu0
  %v2217 = vadd.f32 %v1513, %v2216
  %2218 = vdwg.mxu0
  %2219 = vmatprep.subr.bf16.mxu0 %v1975
  %2220 = vmatpush1.bf16.msra.mxu0 %v1974
  %2221 = vmatprep.subr.bf16.mxu0 %v1979
  %2222 = vmatpush1.bf16.msra.mxu0 %v1978
  %2223 = vmatprep.subr.bf16.mxu0 %v1983
  %2224 = vmatpush1.bf16.msra.mxu0 %v1982
  %2225 = vmatprep.subr.bf16.mxu0 %v1987
  %2226 = vmatpush1.bf16.msra.mxu0 %v1986
  %2227 = vmatprep.subr.bf16.mxu0 %v1991
  %2228 = vmatpush1.bf16.msra.mxu0 %v1990
  %2229 = vmatprep.subr.bf16.mxu0 %v1995
  %2230 = vmatpush1.bf16.msra.mxu0 %v1994
  %2231 = vmatprep.subr.bf16.mxu0 %v1999
  %2232 = vmatpush1.bf16.msra.mxu0 %v1998
  %2233 = vmatprep.subr.bf16.mxu0 %v2003
  %2234 = vmatpush1.bf16.msra.mxu0 %v2002
  %2235 = vmatprep.subr.bf16.mxu0 %v2007
  %2236 = vmatpush1.bf16.msra.mxu0 %v2006
  %2237 = vmatprep.subr.bf16.mxu0 %v2011
  %2238 = vmatpush1.bf16.msra.mxu0 %v2010
  %2239 = vmatprep.subr.bf16.mxu0 %v2015
  %2240 = vmatpush1.bf16.msra.mxu0 %v2014
  %2241 = vmatprep.subr.bf16.mxu0 %v2019
  %2242 = vmatpush1.bf16.msra.mxu0 %v2018
  %2243 = vmatprep.subr.bf16.mxu0 %v2023
  %2244 = vmatpush1.bf16.msra.mxu0 %v2022
  %2245 = vmatprep.subr.bf16.mxu0 %v2027
  %2246 = vmatpush1.bf16.msra.mxu0 %v2026
  %2247 = vmatprep.subr.bf16.mxu0 %v2031
  %2248 = vmatpush1.bf16.msra.mxu0 %v2030
  %2249 = vmatprep.subr.bf16.mxu0 %v2035
  %2250 = vmatpush1.bf16.msra.mxu0 %v2034
  %2251 = vmatprep.mubr.bf16.mxu0 %v1371
  %2252 = vmatmul.mubr.bf16.gmra.mrb[0].mxu0 %v1370
  %v2253 = vpop.f32.mrb[0].mxu0
  %v2254 = vadd.f32 %v2201, %v2253
  %v2255 = vpop.f32.mrb[0].mxu0
  %v2256 = vadd.f32 %v2203, %v2255
  %v2257 = vpop.f32.mrb[0].mxu0
  %v2258 = vadd.f32 %v2205, %v2257
  %v2259 = vpop.f32.mrb[0].mxu0
  %v2260 = vadd.f32 %v2207, %v2259
  %2261 = vmatprep.mubr.bf16.mxu0 %v1375
  %2262 = vmatmul.mubr.bf16.gmra.mrb[0].mxu0 %v1374
  %v2263 = vpop.f32.mrb[0].mxu0
  %v2264 = vadd.f32 %v2211, %v2263
  %v2265 = vpop.f32.mrb[0].mxu0
  %v2266 = vadd.f32 %v2213, %v2265
  %v2267 = vpop.f32.mrb[0].mxu0
  %v2268 = vadd.f32 %v2215, %v2267
  %v2269 = vpop.f32.mrb[0].mxu0
  %v2270 = vadd.f32 %v2217, %v2269
  %2271 = vdwg.mxu0
  %2272 = vmatprep.subr.bf16.mxu0 %v1913
  %2273 = vmatpush1.bf16.msra.mxu0 %v1912
  %2274 = vmatprep.subr.bf16.mxu0 %v1917
  %2275 = vmatpush1.bf16.msra.mxu0 %v1916
  %2276 = vmatprep.subr.bf16.mxu0 %v1921
  %2277 = vmatpush1.bf16.msra.mxu0 %v1920
  %2278 = vmatprep.subr.bf16.mxu0 %v1925
  %2279 = vmatpush1.bf16.msra.mxu0 %v1924
  %2280 = vmatprep.subr.bf16.mxu0 %v1929
  %2281 = vmatpush1.bf16.msra.mxu0 %v1928
  %2282 = vmatprep.subr.bf16.mxu0 %v1933
  %2283 = vmatpush1.bf16.msra.mxu0 %v1932
  %2284 = vmatprep.subr.bf16.mxu0 %v1937
  %2285 = vmatpush1.bf16.msra.mxu0 %v1936
  %2286 = vmatprep.subr.bf16.mxu0 %v1941
  %2287 = vmatpush1.bf16.msra.mxu0 %v1940
  %2288 = vmatprep.subr.bf16.mxu0 %v1945
  %2289 = vmatpush1.bf16.msra.mxu0 %v1944
  %2290 = vmatprep.subr.bf16.mxu0 %v1949
  %2291 = vmatpush1.bf16.msra.mxu0 %v1948
  %2292 = vmatprep.subr.bf16.mxu0 %v1953
  %2293 = vmatpush1.bf16.msra.mxu0 %v1952
  %2294 = vmatprep.subr.bf16.mxu0 %v1957
  %2295 = vmatpush1.bf16.msra.mxu0 %v1956
  %2296 = vmatprep.subr.bf16.mxu0 %v1961
  %2297 = vmatpush1.bf16.msra.mxu0 %v1960
  %2298 = vmatprep.subr.bf16.mxu0 %v1965
  %2299 = vmatpush1.bf16.msra.mxu0 %v1964
  %2300 = vmatprep.subr.bf16.mxu0 %v1969
  %2301 = vmatpush1.bf16.msra.mxu0 %v1968
  %2302 = vmatprep.subr.bf16.mxu0 %v1973
  %2303 = vmatpush1.bf16.msra.mxu0 %v1972
  %2304 = vmatprep.mubr.bf16.mxu0 %v1369
  %2305 = vmatmul.mubr.bf16.gmra.mrb[0].mxu0 %v1368
  %v2306 = vpop.f32.mrb[0].mxu0
  %v2307 = vadd.f32 %v1517, %v2306
  %v2308 = vpop.f32.mrb[0].mxu0
  %v2309 = vadd.f32 %v1521, %v2308
  %v2310 = vpop.f32.mrb[0].mxu0
  %v2311 = vadd.f32 %v1517, %v2310
  %v2312 = vpop.f32.mrb[0].mxu0
  %v2313 = vadd.f32 %v1521, %v2312
  %2314 = vmatprep.mubr.bf16.mxu0 %v1373
  %2315 = vmatmul.mubr.bf16.gmra.mrb[0].mxu0 %v1372
  %v2316 = vpop.f32.mrb[0].mxu0
  %v2317 = vadd.f32 %v1517, %v2316
  %v2318 = vpop.f32.mrb[0].mxu0
  %v2319 = vadd.f32 %v1521, %v2318
  %v2320 = vpop.f32.mrb[0].mxu0
  %v2321 = vadd.f32 %v1517, %v2320
  %v2322 = vpop.f32.mrb[0].mxu0
  %v2323 = vadd.f32 %v1521, %v2322
  %2324 = vdwg.mxu0
  %2325 = vmatprep.subr.bf16.mxu0 %v1977
  %2326 = vmatpush1.bf16.msra.mxu0 %v1976
  %2327 = vmatprep.subr.bf16.mxu0 %v1981
  %2328 = vmatpush1.bf16.msra.mxu0 %v1980
  %2329 = vmatprep.subr.bf16.mxu0 %v1985
  %2330 = vmatpush1.bf16.msra.mxu0 %v1984
  %2331 = vmatprep.subr.bf16.mxu0 %v1989
  %2332 = vmatpush1.bf16.msra.mxu0 %v1988
  %2333 = vmatprep.subr.bf16.mxu0 %v1993
  %2334 = vmatpush1.bf16.msra.mxu0 %v1992
  %2335 = vmatprep.subr.bf16.mxu0 %v1997
  %2336 = vmatpush1.bf16.msra.mxu0 %v1996
  %2337 = vmatprep.subr.bf16.mxu0 %v2001
  %2338 = vmatpush1.bf16.msra.mxu0 %v2000
  %2339 = vmatprep.subr.bf16.mxu0 %v2005
  %2340 = vmatpush1.bf16.msra.mxu0 %v2004
  %2341 = vmatprep.subr.bf16.mxu0 %v2009
  %2342 = vmatpush1.bf16.msra.mxu0 %v2008
  %2343 = vmatprep.subr.bf16.mxu0 %v2013
  %2344 = vmatpush1.bf16.msra.mxu0 %v2012
  %2345 = vmatprep.subr.bf16.mxu0 %v2017
  %2346 = vmatpush1.bf16.msra.mxu0 %v2016
  %2347 = vmatprep.subr.bf16.mxu0 %v2021
  %2348 = vmatpush1.bf16.msra.mxu0 %v2020
  %2349 = vmatprep.subr.bf16.mxu0 %v2025
  %2350 = vmatpush1.bf16.msra.mxu0 %v2024
  %2351 = vmatprep.subr.bf16.mxu0 %v2029
  %2352 = vmatpush1.bf16.msra.mxu0 %v2028
  %2353 = vmatprep.subr.bf16.mxu0 %v2033
  %2354 = vmatpush1.bf16.msra.mxu0 %v2032
  %2355 = vmatprep.subr.bf16.mxu0 %v2037
  %2356 = vmatpush1.bf16.msra.mxu0 %v2036
  %2357 = vmatprep.mubr.bf16.mxu0 %v1371
  %2358 = vmatmul.mubr.bf16.gmra.mrb[0].mxu0 %v1370
  %v2359 = vpop.f32.mrb[0].mxu0
  %v2360 = vadd.f32 %v2307, %v2359
  %v2361 = vpop.f32.mrb[0].mxu0
  %v2362 = vadd.f32 %v2309, %v2361
  %v2363 = vpop.f32.mrb[0].mxu0
  %v2364 = vadd.f32 %v2311, %v2363
  %v2365 = vpop.f32.mrb[0].mxu0
  %v2366 = vadd.f32 %v2313, %v2365
  %2367 = vmatprep.mubr.bf16.mxu0 %v1375
  %2368 = vmatmul.mubr.bf16.gmra.mrb[0].mxu0 %v1374
  %v2369 = vpop.f32.mrb[0].mxu0
  %v2370 = vadd.f32 %v2317, %v2369
  %v2371 = vpop.f32.mrb[0].mxu0
  %v2372 = vadd.f32 %v2319, %v2371
  %v2373 = vpop.f32.mrb[0].mxu0
  %v2374 = vadd.f32 %v2321, %v2373
  %v2375 = vpop.f32.mrb[0].mxu0
  %v2376 = vadd.f32 %v2323, %v2375
  %2377 = vdwg.mxu0
  %v2378 = vmul.f32 %v2254, 0.5
  %v2379 = vmul.f32 %v2256, 0.5
  %v2380 = vmul.f32 %v2360, 0.5
  %v2381 = vmul.f32 %v2362, 0.5
  %v2382 = vmul.f32 %v2258, 0.5
  %v2383 = vmul.f32 %v2260, 0.5
  %v2384 = vmul.f32 %v2364, 0.5
  %v2385 = vmul.f32 %v2366, 0.5
  %v2386 = vmul.f32 %v2264, 0.5
  %v2387 = vmul.f32 %v2266, 0.5
  %v2388 = vmul.f32 %v2370, 0.5
  %v2389 = vmul.f32 %v2372, 0.5
  %v2390 = vmul.f32 %v2268, 0.5
  %v2391 = vmul.f32 %v2270, 0.5
  %v2392 = vmul.f32 %v2374, 0.5
  %v2393 = vmul.f32 %v2376, 0.5
  %v2394 = vtanh.pop %v2378
  %v2395 = vtanh.pop %v2379
  %v2396 = vtanh.pop %v2380
  %v2397 = vtanh.pop %v2381
  %v2398 = vtanh.pop %v2382
  %v2399 = vtanh.pop %v2383
  %v2400 = vtanh.pop %v2384
  %v2401 = vtanh.pop %v2385
  %v2402 = vtanh.pop %v2386
  %v2403 = vtanh.pop %v2387
  %v2404 = vtanh.pop %v2388
  %v2405 = vtanh.pop %v2389
  %v2406 = vtanh.pop %v2390
  %v2407 = vtanh.pop %v2391
  %v2408 = vtanh.pop %v2392
  %v2409 = vtanh.pop %v2393
  %v2410 = vadd.f32 %v2394, 1.0
  %v2411 = vadd.f32 %v2395, 1.0
  %v2412 = vadd.f32 %v2396, 1.0
  %v2413 = vadd.f32 %v2397, 1.0
  %v2414 = vadd.f32 %v2398, 1.0
  %v2415 = vadd.f32 %v2399, 1.0
  %v2416 = vadd.f32 %v2400, 1.0
  %v2417 = vadd.f32 %v2401, 1.0
  %v2418 = vadd.f32 %v2402, 1.0
  %v2419 = vadd.f32 %v2403, 1.0
  %v2420 = vadd.f32 %v2404, 1.0
  %v2421 = vadd.f32 %v2405, 1.0
  %v2422 = vadd.f32 %v2406, 1.0
  %v2423 = vadd.f32 %v2407, 1.0
  %v2424 = vadd.f32 %v2408, 1.0
  %v2425 = vadd.f32 %v2409, 1.0
  %v2426 = vmul.f32 %v2378, %v2410
  %v2427 = vmul.f32 %v2379, %v2411
  %v2428 = vmul.f32 %v2380, %v2412
  %v2429 = vmul.f32 %v2381, %v2413
  %v2430 = vmul.f32 %v2382, %v2414
  %v2431 = vmul.f32 %v2383, %v2415
  %v2432 = vmul.f32 %v2384, %v2416
  %v2433 = vmul.f32 %v2385, %v2417
  %v2434 = vmul.f32 %v2386, %v2418
  %v2435 = vmul.f32 %v2387, %v2419
  %v2436 = vmul.f32 %v2388, %v2420
  %v2437 = vmul.f32 %v2389, %v2421
  %v2438 = vmul.f32 %v2390, %v2422
  %v2439 = vmul.f32 %v2391, %v2423
  %v2440 = vmul.f32 %v2392, %v2424
  %v2441 = vmul.f32 %v2393, %v2425
  %v2442 = vpack.c.bf16 %v2430, %v2426
  %v2443 = vpack.c.bf16 %v2431, %v2427
  %v2444 = vpack.c.bf16 %v2432, %v2428
  %v2445 = vpack.c.bf16 %v2433, %v2429
  %v2446 = vpack.c.bf16 %v2438, %v2434
  %v2447 = vpack.c.bf16 %v2439, %v2435
  %v2448 = vpack.c.bf16 %v2440, %v2436
  %v2449 = vpack.c.bf16 %v2441, %v2437
  %v2450 = vld [vmem:[%s7] sm:$0xf]
  %v2451 = vld [vmem:[%s7 + $0x4] sm:$0xf]
  %v2452 = vld [vmem:[%s7 + $0x8] sm:$0xf]
  %v2453 = vld [vmem:[%s7 + $0xc] sm:$0xf]
  %v2454 = vld [vmem:[%s7 + $0x10] sm:$0xf]
  %v2455 = vld [vmem:[%s7 + $0x14] sm:$0xf]
  %v2456 = vld [vmem:[%s7 + $0x18] sm:$0xf]
  %v2457 = vld [vmem:[%s7 + $0x1c] sm:$0xf]
  %v2458 = vld [vmem:[%s7 + $0x20] sm:$0xf]
  %v2459 = vld [vmem:[%s7 + $0x24] sm:$0xf]
  %v2460 = vld [vmem:[%s7 + $0x28] sm:$0xf]
  %v2461 = vld [vmem:[%s7 + $0x2c] sm:$0xf]
  %v2462 = vld [vmem:[%s7 + $0x30] sm:$0xf]
  %v2463 = vld [vmem:[%s7 + $0x34] sm:$0xf]
  %v2464 = vld [vmem:[%s7 + $0x38] sm:$0xf]
  %v2465 = vld [vmem:[%s7 + $0x3c] sm:$0xf]
  %v2466 = vld [vmem:[%s7 + $0x40] sm:$0xf]
  %v2467 = vld [vmem:[%s7 + $0x44] sm:$0xf]
  %v2468 = vld [vmem:[%s7 + $0x48] sm:$0xf]
  %v2469 = vld [vmem:[%s7 + $0x4c] sm:$0xf]
  %v2470 = vld [vmem:[%s7 + $0x50] sm:$0xf]
  %v2471 = vld [vmem:[%s7 + $0x54] sm:$0xf]
  %v2472 = vld [vmem:[%s7 + $0x58] sm:$0xf]
  %v2473 = vld [vmem:[%s7 + $0x5c] sm:$0xf]
  %v2474 = vld [vmem:[%s7 + $0x60] sm:$0xf]
  %v2475 = vld [vmem:[%s7 + $0x64] sm:$0xf]
  %v2476 = vld [vmem:[%s7 + $0x68] sm:$0xf]
  %v2477 = vld [vmem:[%s7 + $0x6c] sm:$0xf]
  %v2478 = vld [vmem:[%s7 + $0x70] sm:$0xf]
  %v2479 = vld [vmem:[%s7 + $0x74] sm:$0xf]
  %v2480 = vld [vmem:[%s7 + $0x78] sm:$0xf]
  %v2481 = vld [vmem:[%s7 + $0x7c] sm:$0xf]
  %v2482 = vld [vmem:[%s7 + $0x80] sm:$0xf]
  %v2483 = vld [vmem:[%s7 + $0x84] sm:$0xf]
  %v2484 = vld [vmem:[%s7 + $0x88] sm:$0xf]
  %v2485 = vld [vmem:[%s7 + $0x8c] sm:$0xf]
  %v2486 = vld [vmem:[%s7 + $0x90] sm:$0xf]
  %v2487 = vld [vmem:[%s7 + $0x94] sm:$0xf]
  %v2488 = vld [vmem:[%s7 + $0x98] sm:$0xf]
  %v2489 = vld [vmem:[%s7 + $0x9c] sm:$0xf]
  %v2490 = vld [vmem:[%s7 + $0xa0] sm:$0xf]
  %v2491 = vld [vmem:[%s7 + $0xa4] sm:$0xf]
  %v2492 = vld [vmem:[%s7 + $0xa8] sm:$0xf]
  %v2493 = vld [vmem:[%s7 + $0xac] sm:$0xf]
  %v2494 = vld [vmem:[%s7 + $0xb0] sm:$0xf]
  %v2495 = vld [vmem:[%s7 + $0xb4] sm:$0xf]
  %v2496 = vld [vmem:[%s7 + $0xb8] sm:$0xf]
  %v2497 = vld [vmem:[%s7 + $0xbc] sm:$0xf]
  %v2498 = vld [vmem:[%s7 + $0xc0] sm:$0xf]
  %v2499 = vld [vmem:[%s7 + $0xc4] sm:$0xf]
  %v2500 = vld [vmem:[%s7 + $0xc8] sm:$0xf]
  %v2501 = vld [vmem:[%s7 + $0xcc] sm:$0xf]
  %v2502 = vld [vmem:[%s7 + $0xd0] sm:$0xf]
  %v2503 = vld [vmem:[%s7 + $0xd4] sm:$0xf]
  %v2504 = vld [vmem:[%s7 + $0xd8] sm:$0xf]
  %v2505 = vld [vmem:[%s7 + $0xdc] sm:$0xf]
  %v2506 = vld [vmem:[%s7 + $0xe0] sm:$0xf]
  %v2507 = vld [vmem:[%s7 + $0xe4] sm:$0xf]
  %v2508 = vld [vmem:[%s7 + $0xe8] sm:$0xf]
  %v2509 = vld [vmem:[%s7 + $0xec] sm:$0xf]
  %v2510 = vld [vmem:[%s7 + $0xf0] sm:$0xf]
  %v2511 = vld [vmem:[%s7 + $0xf4] sm:$0xf]
  %v2512 = vld [vmem:[%s7 + $0xf8] sm:$0xf]
  %v2513 = vld [vmem:[%s7 + $0xfc] sm:$0xf]
  %v2514 = vld [vmem:[%s8] sm:$0x1]
  %v2516 = vlaneseq
  %v2517 = vshrl.u32 %v2516, 7
  %v2518 = vsub.s32 0, %v2517
  %v2519 = vrot.slane %v2514, %v2518
  %v2585 = vunpack.c.l.b16 %v2450
  %v2586 = vunpack.c.l.b16 %v2451
  %v2587 = vunpack.c.l.b16 %v2452
  %v2588 = vunpack.c.l.b16 %v2453
  %v2589 = vunpack.c.l.b16 %v2454
  %v2590 = vunpack.c.l.b16 %v2455
  %v2591 = vunpack.c.l.b16 %v2456
  %v2592 = vunpack.c.l.b16 %v2457
  %v2593 = vunpack.c.l.b16 %v2458
  %v2594 = vunpack.c.l.b16 %v2459
  %v2595 = vunpack.c.l.b16 %v2460
  %v2596 = vunpack.c.l.b16 %v2461
  %v2597 = vunpack.c.l.b16 %v2462
  %v2598 = vunpack.c.l.b16 %v2463
  %v2599 = vunpack.c.l.b16 %v2464
  %v2600 = vunpack.c.l.b16 %v2465
  %v2601 = vunpack.c.l.b16 %v2466
  %v2602 = vunpack.c.l.b16 %v2467
  %v2603 = vunpack.c.l.b16 %v2468
  %v2604 = vunpack.c.l.b16 %v2469
  %v2605 = vunpack.c.l.b16 %v2470
  %v2606 = vunpack.c.l.b16 %v2471
  %v2607 = vunpack.c.l.b16 %v2472
  %v2608 = vunpack.c.l.b16 %v2473
  %v2609 = vunpack.c.l.b16 %v2474
  %v2610 = vunpack.c.l.b16 %v2475
  %v2611 = vunpack.c.l.b16 %v2476
  %v2612 = vunpack.c.l.b16 %v2477
  %v2613 = vunpack.c.l.b16 %v2478
  %v2614 = vunpack.c.l.b16 %v2479
  %v2615 = vunpack.c.l.b16 %v2480
  %v2616 = vunpack.c.l.b16 %v2481
  %v2617 = vunpack.c.l.b16 %v2482
  %v2618 = vunpack.c.l.b16 %v2483
  %v2619 = vunpack.c.l.b16 %v2484
  %v2620 = vunpack.c.l.b16 %v2485
  %v2621 = vunpack.c.l.b16 %v2486
  %v2622 = vunpack.c.l.b16 %v2487
  %v2623 = vunpack.c.l.b16 %v2488
  %v2624 = vunpack.c.l.b16 %v2489
  %v2625 = vunpack.c.l.b16 %v2490
  %v2626 = vunpack.c.l.b16 %v2491
  %v2627 = vunpack.c.l.b16 %v2492
  %v2628 = vunpack.c.l.b16 %v2493
  %v2629 = vunpack.c.l.b16 %v2494
  %v2630 = vunpack.c.l.b16 %v2495
  %v2631 = vunpack.c.l.b16 %v2496
  %v2632 = vunpack.c.l.b16 %v2497
  %v2633 = vunpack.c.l.b16 %v2498
  %v2634 = vunpack.c.l.b16 %v2499
  %v2635 = vunpack.c.l.b16 %v2500
  %v2636 = vunpack.c.l.b16 %v2501
  %v2637 = vunpack.c.l.b16 %v2502
  %v2638 = vunpack.c.l.b16 %v2503
  %v2639 = vunpack.c.l.b16 %v2504
  %v2640 = vunpack.c.l.b16 %v2505
  %v2641 = vunpack.c.l.b16 %v2506
  %v2642 = vunpack.c.l.b16 %v2507
  %v2643 = vunpack.c.l.b16 %v2508
  %v2644 = vunpack.c.l.b16 %v2509
  %v2645 = vunpack.c.l.b16 %v2510
  %v2646 = vunpack.c.l.b16 %v2511
  %v2647 = vunpack.c.l.b16 %v2512
  %v2648 = vunpack.c.l.b16 %v2513
  %v2649 = vpack.c.b16 %v2586, %v2585
  %v2650 = vpack.c.b16 %v2588, %v2587
  %v2651 = vpack.c.b16 %v2590, %v2589
  %v2652 = vpack.c.b16 %v2592, %v2591
  %v2653 = vpack.c.b16 %v2594, %v2593
  %v2654 = vpack.c.b16 %v2596, %v2595
  %v2655 = vpack.c.b16 %v2598, %v2597
  %v2656 = vpack.c.b16 %v2600, %v2599
  %v2657 = vpack.c.b16 %v2602, %v2601
  %v2658 = vpack.c.b16 %v2604, %v2603
  %v2659 = vpack.c.b16 %v2606, %v2605
  %v2660 = vpack.c.b16 %v2608, %v2607
  %v2661 = vpack.c.b16 %v2610, %v2609
  %v2662 = vpack.c.b16 %v2612, %v2611
  %v2663 = vpack.c.b16 %v2614, %v2613
  %v2664 = vpack.c.b16 %v2616, %v2615
  %v2665 = vpack.c.b16 %v2618, %v2617
  %v2666 = vpack.c.b16 %v2620, %v2619
  %v2667 = vpack.c.b16 %v2622, %v2621
  %v2668 = vpack.c.b16 %v2624, %v2623
  %v2669 = vpack.c.b16 %v2626, %v2625
  %v2670 = vpack.c.b16 %v2628, %v2627
  %v2671 = vpack.c.b16 %v2630, %v2629
  %v2672 = vpack.c.b16 %v2632, %v2631
  %v2673 = vpack.c.b16 %v2634, %v2633
  %v2674 = vpack.c.b16 %v2636, %v2635
  %v2675 = vpack.c.b16 %v2638, %v2637
  %v2676 = vpack.c.b16 %v2640, %v2639
  %v2677 = vpack.c.b16 %v2642, %v2641
  %v2678 = vpack.c.b16 %v2644, %v2643
  %v2679 = vpack.c.b16 %v2646, %v2645
  %v2680 = vpack.c.b16 %v2648, %v2647
  %2713 = vmatprep.subr.bf16.mxu0 0
  %2714 = vmatpush1.bf16.msra.mxu0 %v2649
  %2715 = vmatprep.subr.bf16.mxu0 0
  %2716 = vmatpush1.bf16.msra.mxu0 %v2650
  %2717 = vmatprep.subr.bf16.mxu0 0
  %2718 = vmatpush1.bf16.msra.mxu0 %v2651
  %2719 = vmatprep.subr.bf16.mxu0 0
  %2720 = vmatpush1.bf16.msra.mxu0 %v2652
  %2721 = vmatprep.subr.bf16.mxu0 0
  %2722 = vmatpush1.bf16.msra.mxu0 %v2653
  %2723 = vmatprep.subr.bf16.mxu0 0
  %2724 = vmatpush1.bf16.msra.mxu0 %v2654
  %2725 = vmatprep.subr.bf16.mxu0 0
  %2726 = vmatpush1.bf16.msra.mxu0 %v2655
  %2727 = vmatprep.subr.bf16.mxu0 0
  %2728 = vmatpush1.bf16.msra.mxu0 %v2656
  %2729 = vmatprep.subr.bf16.mxu0 0
  %2730 = vmatpush1.bf16.msra.mxu0 %v2657
  %2731 = vmatprep.subr.bf16.mxu0 0
  %2732 = vmatpush1.bf16.msra.mxu0 %v2658
  %2733 = vmatprep.subr.bf16.mxu0 0
  %2734 = vmatpush1.bf16.msra.mxu0 %v2659
  %2735 = vmatprep.subr.bf16.mxu0 0
  %2736 = vmatpush1.bf16.msra.mxu0 %v2660
  %2737 = vmatprep.subr.bf16.mxu0 0
  %2738 = vmatpush1.bf16.msra.mxu0 %v2661
  %2739 = vmatprep.subr.bf16.mxu0 0
  %2740 = vmatpush1.bf16.msra.mxu0 %v2662
  %2741 = vmatprep.subr.bf16.mxu0 0
  %2742 = vmatpush1.bf16.msra.mxu0 %v2663
  %2743 = vmatprep.subr.bf16.mxu0 0
  %2744 = vmatpush1.bf16.msra.mxu0 %v2664
  %2745 = vmatprep.mubr.bf16.mxu0 %v2443
  %2746 = vmatmul.mubr.bf16.gmra.mrb[0].mxu0 %v2442
  %v2747 = vpop.f32.mrb[0].mxu0
  %v2748 = vadd.f32 %v2519, %v2747
  %v2749 = vpop.f32.mrb[0].mxu0
  %v2750 = vpop.f32.mrb[0].mxu0
  %v2751 = vadd.f32 %v2519, %v2750
  %v2752 = vpop.f32.mrb[0].mxu0
  %2753 = vmatprep.mubr.bf16.mxu0 %v2447
  %2754 = vmatmul.mubr.bf16.gmra.mrb[0].mxu0 %v2446
  %v2755 = vpop.f32.mrb[0].mxu0
  %v2756 = vadd.f32 %v2519, %v2755
  %v2757 = vpop.f32.mrb[0].mxu0
  %v2758 = vpop.f32.mrb[0].mxu0
  %v2759 = vadd.f32 %v2519, %v2758
  %v2760 = vpop.f32.mrb[0].mxu0
  %2761 = vdwg.mxu0
  %2762 = vmatprep.subr.bf16.mxu0 0
  %2763 = vmatpush1.bf16.msra.mxu0 %v2665
  %2764 = vmatprep.subr.bf16.mxu0 0
  %2765 = vmatpush1.bf16.msra.mxu0 %v2666
  %2766 = vmatprep.subr.bf16.mxu0 0
  %2767 = vmatpush1.bf16.msra.mxu0 %v2667
  %2768 = vmatprep.subr.bf16.mxu0 0
  %2769 = vmatpush1.bf16.msra.mxu0 %v2668
  %2770 = vmatprep.subr.bf16.mxu0 0
  %2771 = vmatpush1.bf16.msra.mxu0 %v2669
  %2772 = vmatprep.subr.bf16.mxu0 0
  %2773 = vmatpush1.bf16.msra.mxu0 %v2670
  %2774 = vmatprep.subr.bf16.mxu0 0
  %2775 = vmatpush1.bf16.msra.mxu0 %v2671
  %2776 = vmatprep.subr.bf16.mxu0 0
  %2777 = vmatpush1.bf16.msra.mxu0 %v2672
  %2778 = vmatprep.subr.bf16.mxu0 0
  %2779 = vmatpush1.bf16.msra.mxu0 %v2673
  %2780 = vmatprep.subr.bf16.mxu0 0
  %2781 = vmatpush1.bf16.msra.mxu0 %v2674
  %2782 = vmatprep.subr.bf16.mxu0 0
  %2783 = vmatpush1.bf16.msra.mxu0 %v2675
  %2784 = vmatprep.subr.bf16.mxu0 0
  %2785 = vmatpush1.bf16.msra.mxu0 %v2676
  %2786 = vmatprep.subr.bf16.mxu0 0
  %2787 = vmatpush1.bf16.msra.mxu0 %v2677
  %2788 = vmatprep.subr.bf16.mxu0 0
  %2789 = vmatpush1.bf16.msra.mxu0 %v2678
  %2790 = vmatprep.subr.bf16.mxu0 0
  %2791 = vmatpush1.bf16.msra.mxu0 %v2679
  %2792 = vmatprep.subr.bf16.mxu0 0
  %2793 = vmatpush1.bf16.msra.mxu0 %v2680
  %2794 = vmatprep.mubr.bf16.mxu0 %v2445
  %2795 = vmatmul.mubr.bf16.gmra.mrb[0].mxu0 %v2444
  %v2796 = vpop.f32.mrb[0].mxu0
  %v2797 = vadd.f32 %v2748, %v2796
  %v2798 = vpop.f32.mrb[0].mxu0
  %v2799 = vpop.f32.mrb[0].mxu0
  %v2800 = vadd.f32 %v2751, %v2799
  %v2801 = vpop.f32.mrb[0].mxu0
  %2802 = vmatprep.mubr.bf16.mxu0 %v2449
  %2803 = vmatmul.mubr.bf16.gmra.mrb[0].mxu0 %v2448
  %v2804 = vpop.f32.mrb[0].mxu0
  %v2805 = vadd.f32 %v2756, %v2804
  %v2806 = vpop.f32.mrb[0].mxu0
  %v2807 = vpop.f32.mrb[0].mxu0
  %v2808 = vadd.f32 %v2759, %v2807
  %v2809 = vpop.f32.mrb[0].mxu0
  %2810 = vdwg.mxu0
  %2811 = vst [vmem:[%s9] sm:$0xff] %v2797
  %2812 = vst [vmem:[%s9 + $0x8] sm:$0xff] %v2800
  %2813 = vst [vmem:[%s9 + $0x10] sm:$0xff] %v2805
  %2814 = vst [vmem:[%s9 + $0x18] sm:$0xff] %v2808
  // Predicated region
  $region38: #{text_decoder.1} parent=0 // pred_check
    _
  $region39: #{text_decoder.1} parent=0 // pred_check_branch
    %2816 = sbr.rel (0) target = $region41
  $region40: #{text_decoder.1} parent=0 // pred_region
    _
  $region41: #{text_decoder.1} parent=0 // pred_fallthru
    _
  // Predicated region
  $region42: #{text_decoder.1} parent=0 // pred_check
    _
  $region43: #{text_decoder.1} parent=0 // pred_check_branch
    %2818 = sbr.rel (0) target = $region45
  $region44: #{text_decoder.1} parent=0 // pred_region
    _
  $region45: #{text_decoder.1} parent=0 // pred_fallthru
    _

</llo_original>
